<compile_context>
chip_gen: v7x
topology: tpu7x:2x2x1
jax: 0.10.0
libtpu: 0.0.40
codegen_flags: <defaults>
</compile_context>

<pallas_src>
import functools

import jax
import jax.numpy as jnp
from jax import lax
from jax.experimental import pallas as pl
from jax.experimental.pallas import tpu as pltpu

D_MODEL = 9
N_HEADS = 3
HEAD_SIZE = D_MODEL // N_HEADS  # 3


def _round_up8(v):
    return -(-v // 8) * 8


def _param_layout(d_model, n_heads, head_size):
    """Row/lane layout of the single packed parameter slab (all offsets static,
    every logical chunk starts on a sublane-aligned row)."""
    w_qkv_row = 0                                       # (d_model, 3*nH*H)
    b_qkv_row = _round_up8(w_qkv_row + d_model)         # (1, 3*nH*H)
    wo_base = _round_up8(b_qkv_row + 1)                 # n_heads blocks of (H, D)
    wo_stride = _round_up8(head_size)
    b_o_row = wo_base + n_heads * wo_stride             # (1, D)
    total_rows = _round_up8(b_o_row + 1)
    lanes = -(-max(3 * n_heads * head_size, d_model) // 128) * 128
    return dict(w_qkv_row=w_qkv_row, b_qkv_row=b_qkv_row, wo_base=wo_base,
                wo_stride=wo_stride, b_o_row=b_o_row,
                total_rows=total_rows, lanes=lanes)


def pack_mha_params(wq, bq, wk, bk, wv, bv, w_o, b_o):
    """Call ONCE at parameter-init time.

    wq/wk/wv: (n_heads, d_model, head_size)   per-head weights, (in, out) layout
    bq/bk/bv: (n_heads, head_size)
    w_o:      (d_model, d_model)              (in, out) layout
    b_o:      (d_model,)
    Returns a single (rows, 128) f32 slab (Q scale folded into Q weights/bias).
    """
    n_heads, d_model, head_size = wq.shape
    hh = n_heads * head_size
    scale = 1.0 / (head_size ** 0.5)
    lay = _param_layout(d_model, n_heads, head_size)

    def pack_w(w):  # (nH, D, H) -> (D, nH*H)
        return jnp.transpose(w, (1, 0, 2)).reshape(d_model, hh)

    def pack_b(b):  # (nH, H) -> (nH*H,)
        return b.reshape(hh)

    w_qkv = jnp.concatenate(
        [pack_w(wq) * scale, pack_w(wk), pack_w(wv)], axis=1)         # (D, 3*hh)
    b_qkv = jnp.concatenate(
        [pack_b(bq) * scale, pack_b(bk), pack_b(bv)])                 # (3*hh,)

    slab = jnp.zeros((lay["total_rows"], lay["lanes"]), jnp.float32)
    slab = slab.at[lay["w_qkv_row"]:lay["w_qkv_row"] + d_model, 0:3 * hh].set(w_qkv)
    slab = slab.at[lay["b_qkv_row"], 0:3 * hh].set(b_qkv)
    for h in range(n_heads):
        row = lay["wo_base"] + h * lay["wo_stride"]
        slab = slab.at[row:row + head_size, 0:d_model].set(
            w_o[h * head_size:(h + 1) * head_size, :])
    slab = slab.at[lay["b_o_row"], 0:d_model].set(b_o)
    return slab


def _mha_kernel(x_ref, p_ref, o_ref, *, n_heads, head_size, d_model,
                b_qkv_row, wo_base, wo_stride, b_o_row):
    hh = n_heads * head_size
    x = x_ref[...].astype(jnp.float32)                       # (B, S, D)

    # Static, sublane-aligned views into the single packed parameter slab.
    w_qkv = p_ref[0:d_model, 0:3 * hh]                       # (D, 3*hh), Q pre-scaled
    b_qkv = p_ref[b_qkv_row:b_qkv_row + 1, 0:3 * hh]         # (1, 3*hh)

    # Single fused projection for all heads' Q, K, V:  (B, S, 3*hh)
    # TODO(synk): at real ViT sizes cast operands to bf16 (keep f32 accumulate)
    # for the MXU-native path; irrelevant at this toy size.
    qkv = lax.dot_general(
        x, w_qkv,
        dimension_numbers=(((2,), (0,)), ((), ())),
        preferred_element_type=jnp.float32) + b_qkv

    acc = None
    for h in range(n_heads):
        lo = h * head_size
        hi = lo + head_size
        # TODO(synk): at real head counts, make the head axis a dot_general
        # batch dim instead of this unrolled loop of lane slices.
        q = qkv[:, :, lo:hi]                                 # (B, S, H)  (pre-scaled)
        k = qkv[:, :, hh + lo:hh + hi]                       # (B, S, H)
        v = qkv[:, :, 2 * hh + lo:2 * hh + hi]               # (B, S, H)

        # scores = Q @ K^T without materializing K^T (batched over B).
        s = lax.dot_general(
            q, k,
            dimension_numbers=(((2,), (2,)), ((0,), (0,))),
            preferred_element_type=jnp.float32)              # (B, S, S)

        # Numerically-stable softmax; exact division (kernel is latency-bound,
        # the approximate-EUP reciprocal bought nothing here).
        s = s - jnp.max(s, axis=-1, keepdims=True)
        p = jnp.exp(s)
        p = p / jnp.sum(p, axis=-1, keepdims=True)

        ctx = lax.dot_general(
            p, v,
            dimension_numbers=(((2,), (1,)), ((0,), (0,))),
            preferred_element_type=jnp.float32)              # (B, S, H)

        # Fused output projection: each head contracts with its sublane-aligned
        # W_o block and accumulates (no lane concatenation).
        row = wo_base + h * wo_stride
        wo_h = p_ref[row:row + head_size, 0:d_model]         # (H, D)
        term = lax.dot_general(
            ctx, wo_h,
            dimension_numbers=(((2,), (0,)), ((), ())),
            preferred_element_type=jnp.float32)              # (B, S, D)
        acc = term if acc is None else acc + term

    out = acc + p_ref[b_o_row:b_o_row + 1, 0:d_model]        # (1, D) broadcasts
    o_ref[...] = out.astype(o_ref.dtype)
    # TODO(synk): at real ViT sizes (d_model multiple of 128) the output store
    # becomes unmasked vst; also add a "parallel" batch grid axis for v7x's
    # two TensorCores and re-derive tiling for its 64 MiB VMEM.


def multi_head_attention(x, packed_params, *, n_heads, head_size):
    """Forward pass. `packed_params` comes from pack_mha_params() (done once)."""
    B, S, D = x.shape
    lay = _param_layout(D, n_heads, head_size)

    kernel = functools.partial(
        _mha_kernel, n_heads=n_heads, head_size=head_size, d_model=D,
        b_qkv_row=lay["b_qkv_row"], wo_base=lay["wo_base"],
        wo_stride=lay["wo_stride"], b_o_row=lay["b_o_row"])

    vmem = pl.BlockSpec(memory_space=pltpu.MemorySpace.VMEM)
    # Single invocation (no grid): the whole problem fits trivially in VMEM and
    # only two DMAs (x, params) are issued.
    return pl.pallas_call(
        kernel,
        out_shape=jax.ShapeDtypeStruct((B, S, D), x.dtype),
        in_specs=[vmem, vmem],
        out_specs=vmem,
    )(x, packed_params)


def _reference(x, wq, bq, wk, bk, wv, bv, w_o, b_o, head_size):
    """Pure-JAX reference of the PyTorch MultiHeadAttention forward."""
    hp = jax.lax.Precision.HIGHEST
    outs = []
    for h in range(wq.shape[0]):
        q = jnp.einsum("bsd,dh->bsh", x, wq[h], precision=hp) + bq[h]
        k = jnp.einsum("bsd,dh->bsh", x, wk[h], precision=hp) + bk[h]
        v = jnp.einsum("bsd,dh->bsh", x, wv[h], precision=hp) + bv[h]
        a = jnp.einsum("bqh,bkh->bqk", q, k, precision=hp) / (head_size ** 0.5)
        a = jax.nn.softmax(a, axis=-1)
        outs.append(jnp.einsum("bqk,bkh->bqh", a, v, precision=hp))
    cat = jnp.concatenate(outs, axis=-1)
    return jnp.einsum("bsd,de->bse", cat, w_o, precision=hp) + b_o


if __name__ == "__main__":
    key = jax.random.PRNGKey(0)
    (kx, kwq, kbq, kwk, kbk, kwv, kbv, kwo, kbo) = jax.random.split(key, 9)

    B, S = 2, 8
    x = jax.random.normal(kx, (B, S, D_MODEL), dtype=jnp.float32)

    # nn.Linear-style params (weights stored pre-transposed as (in, out)).
    bound = 1.0 / (D_MODEL ** 0.5)
    wq = jax.random.uniform(kwq, (N_HEADS, D_MODEL, HEAD_SIZE), jnp.float32, -bound, bound)
    bq = jax.random.uniform(kbq, (N_HEADS, HEAD_SIZE), jnp.float32, -bound, bound)
    wk = jax.random.uniform(kwk, (N_HEADS, D_MODEL, HEAD_SIZE), jnp.float32, -bound, bound)
    bk = jax.random.uniform(kbk, (N_HEADS, HEAD_SIZE), jnp.float32, -bound, bound)
    wv = jax.random.uniform(kwv, (N_HEADS, D_MODEL, HEAD_SIZE), jnp.float32, -bound, bound)
    bv = jax.random.uniform(kbv, (N_HEADS, HEAD_SIZE), jnp.float32, -bound, bound)
    w_o = jax.random.uniform(kwo, (D_MODEL, D_MODEL), jnp.float32, -bound, bound)
    b_o = jax.random.uniform(kbo, (D_MODEL,), jnp.float32, -bound, bound)

    # Parameter packing happens ONCE (init time), not per forward call.
    packed = jax.block_until_ready(pack_mha_params(wq, bq, wk, bk, wv, bv, w_o, b_o))

    forward = jax.jit(functools.partial(
        multi_head_attention, n_heads=N_HEADS, head_size=HEAD_SIZE))

    out = forward(x, packed)
    out = jax.block_until_ready(out)

    ref = _reference(x, wq, bq, wk, bk, wv, bv, w_o, b_o, HEAD_SIZE)
    assert out.shape == (B, S, D_MODEL)
    # Exact-division softmax (no approx reciprocal) -> tight agreement.
    assert jnp.allclose(out, ref, atol=1e-5, rtol=1e-5), "mismatch vs reference"

    print("KERNEL_OK")
</pallas_src>

<mosaic_0001>
module attributes {stable_mosaic.version = 11 : i64} {
  func.func @_mha_kernel(%arg0: memref<2x8x9xf32, #tpu.memory_space<vmem>>, %arg1: memref<56x128xf32, #tpu.memory_space<vmem>>, %arg2: memref<2x8x9xf32, #tpu.memory_space<vmem>>) attributes {dimension_semantics = [], scalar_prefetch = 0 : i64, scratch_operands = 0 : i64, tpu.core_type = #tpu.core_type<tc>} {
    %c0 = arith.constant 0 : index
    %c0_0 = arith.constant 0 : index
    %c0_1 = arith.constant 0 : index
    %0 = vector.load %arg0[%c0, %c0_0, %c0_1] : memref<2x8x9xf32, #tpu.memory_space<vmem>>, vector<2x8x9xf32>
    %c0_2 = arith.constant 0 : index
    %c0_3 = arith.constant 0 : index
    %1 = vector.load %arg1[%c0_2, %c0_3] : memref<56x128xf32, #tpu.memory_space<vmem>>, vector<9x27xf32>
    %c16 = arith.constant 16 : index
    %c0_4 = arith.constant 0 : index
    %2 = vector.load %arg1[%c16, %c0_4] : memref<56x128xf32, #tpu.memory_space<vmem>>, vector<1x27xf32>
    %cst = arith.constant dense<0.000000e+00> : vector<2x8x27xf32>
    %3 = tpu.matmul %0, %1, %cst {dimension_numbers = #tpu.dot_dimension_numbers<[2], [0], [0, 1], [1], [0, 0, 0, 1, 1, 1], [], []>} : vector<2x8x9xf32>, vector<9x27xf32>, vector<2x8x27xf32> -> vector<2x8x27xf32>
    %4 = vector.shape_cast %2 : vector<1x27xf32> to vector<1x1x27xf32>
    %5 = vector.broadcast %4 : vector<1x1x27xf32> to vector<2x8x27xf32>
    %6 = arith.addf %3, %5 : vector<2x8x27xf32>
    %7 = vector.extract_strided_slice %6 {offsets = [0, 0, 0], sizes = [2, 8, 3], strides = [1, 1, 1]} : vector<2x8x27xf32> to vector<2x8x3xf32>
    %8 = vector.extract_strided_slice %6 {offsets = [0, 0, 9], sizes = [2, 8, 3], strides = [1, 1, 1]} : vector<2x8x27xf32> to vector<2x8x3xf32>
    %9 = vector.extract_strided_slice %6 {offsets = [0, 0, 18], sizes = [2, 8, 3], strides = [1, 1, 1]} : vector<2x8x27xf32> to vector<2x8x3xf32>
    %cst_5 = arith.constant dense<0.000000e+00> : vector<2x8x8xf32>
    %10 = tpu.matmul %7, %8, %cst_5 {dimension_numbers = #tpu.dot_dimension_numbers<[2], [2], [1], [1], [0, 0, 0, 1, 1, 1], [0], [0]>} : vector<2x8x3xf32>, vector<2x8x3xf32>, vector<2x8x8xf32> -> vector<2x8x8xf32>
    %cst_6 = arith.constant dense<0xFF800000> : vector<2x8xf32>
    %11 = vector.multi_reduction <maximumf>, %10, %cst_6 [2] : vector<2x8x8xf32> to vector<2x8xf32>
    %12 = vector.shape_cast %11 : vector<2x8xf32> to vector<2x8x1xf32>
    %13 = vector.broadcast %12 : vector<2x8x1xf32> to vector<2x8x8xf32>
    %14 = arith.subf %10, %13 : vector<2x8x8xf32>
    %15 = math.exp %14 : vector<2x8x8xf32>
    %cst_7 = arith.constant dense<0.000000e+00> : vector<2x8xf32>
    %16 = vector.multi_reduction <add>, %15, %cst_7 [2] : vector<2x8x8xf32> to vector<2x8xf32>
    %17 = vector.shape_cast %16 : vector<2x8xf32> to vector<2x8x1xf32>
    %18 = vector.broadcast %17 : vector<2x8x1xf32> to vector<2x8x8xf32>
    %19 = arith.divf %15, %18 : vector<2x8x8xf32>
    %cst_8 = arith.constant dense<0.000000e+00> : vector<2x8x3xf32>
    %20 = tpu.matmul %19, %9, %cst_8 {dimension_numbers = #tpu.dot_dimension_numbers<[2], [1], [1], [2], [0, 0, 0, 1, 1, 2], [0], [0]>} : vector<2x8x8xf32>, vector<2x8x3xf32>, vector<2x8x3xf32> -> vector<2x8x3xf32>
    %c24 = arith.constant 24 : index
    %c0_9 = arith.constant 0 : index
    %21 = vector.load %arg1[%c24, %c0_9] : memref<56x128xf32, #tpu.memory_space<vmem>>, vector<3x9xf32>
    %cst_10 = arith.constant dense<0.000000e+00> : vector<2x8x9xf32>
    %22 = tpu.matmul %20, %21, %cst_10 {dimension_numbers = #tpu.dot_dimension_numbers<[2], [0], [0, 1], [1], [0, 0, 0, 1, 1, 1], [], []>} : vector<2x8x3xf32>, vector<3x9xf32>, vector<2x8x9xf32> -> vector<2x8x9xf32>
    %23 = vector.extract_strided_slice %6 {offsets = [0, 0, 3], sizes = [2, 8, 3], strides = [1, 1, 1]} : vector<2x8x27xf32> to vector<2x8x3xf32>
    %24 = vector.extract_strided_slice %6 {offsets = [0, 0, 12], sizes = [2, 8, 3], strides = [1, 1, 1]} : vector<2x8x27xf32> to vector<2x8x3xf32>
    %25 = vector.extract_strided_slice %6 {offsets = [0, 0, 21], sizes = [2, 8, 3], strides = [1, 1, 1]} : vector<2x8x27xf32> to vector<2x8x3xf32>
    %cst_11 = arith.constant dense<0.000000e+00> : vector<2x8x8xf32>
    %26 = tpu.matmul %23, %24, %cst_11 {dimension_numbers = #tpu.dot_dimension_numbers<[2], [2], [1], [1], [0, 0, 0, 1, 1, 1], [0], [0]>} : vector<2x8x3xf32>, vector<2x8x3xf32>, vector<2x8x8xf32> -> vector<2x8x8xf32>
    %cst_12 = arith.constant dense<0xFF800000> : vector<2x8xf32>
    %27 = vector.multi_reduction <maximumf>, %26, %cst_12 [2] : vector<2x8x8xf32> to vector<2x8xf32>
    %28 = vector.shape_cast %27 : vector<2x8xf32> to vector<2x8x1xf32>
    %29 = vector.broadcast %28 : vector<2x8x1xf32> to vector<2x8x8xf32>
    %30 = arith.subf %26, %29 : vector<2x8x8xf32>
    %31 = math.exp %30 : vector<2x8x8xf32>
    %cst_13 = arith.constant dense<0.000000e+00> : vector<2x8xf32>
    %32 = vector.multi_reduction <add>, %31, %cst_13 [2] : vector<2x8x8xf32> to vector<2x8xf32>
    %33 = vector.shape_cast %32 : vector<2x8xf32> to vector<2x8x1xf32>
    %34 = vector.broadcast %33 : vector<2x8x1xf32> to vector<2x8x8xf32>
    %35 = arith.divf %31, %34 : vector<2x8x8xf32>
    %cst_14 = arith.constant dense<0.000000e+00> : vector<2x8x3xf32>
    %36 = tpu.matmul %35, %25, %cst_14 {dimension_numbers = #tpu.dot_dimension_numbers<[2], [1], [1], [2], [0, 0, 0, 1, 1, 2], [0], [0]>} : vector<2x8x8xf32>, vector<2x8x3xf32>, vector<2x8x3xf32> -> vector<2x8x3xf32>
    %c32 = arith.constant 32 : index
    %c0_15 = arith.constant 0 : index
    %37 = vector.load %arg1[%c32, %c0_15] : memref<56x128xf32, #tpu.memory_space<vmem>>, vector<3x9xf32>
    %cst_16 = arith.constant dense<0.000000e+00> : vector<2x8x9xf32>
    %38 = tpu.matmul %36, %37, %cst_16 {dimension_numbers = #tpu.dot_dimension_numbers<[2], [0], [0, 1], [1], [0, 0, 0, 1, 1, 1], [], []>} : vector<2x8x3xf32>, vector<3x9xf32>, vector<2x8x9xf32> -> vector<2x8x9xf32>
    %39 = arith.addf %22, %38 : vector<2x8x9xf32>
    %40 = vector.extract_strided_slice %6 {offsets = [0, 0, 6], sizes = [2, 8, 3], strides = [1, 1, 1]} : vector<2x8x27xf32> to vector<2x8x3xf32>
    %41 = vector.extract_strided_slice %6 {offsets = [0, 0, 15], sizes = [2, 8, 3], strides = [1, 1, 1]} : vector<2x8x27xf32> to vector<2x8x3xf32>
    %42 = vector.extract_strided_slice %6 {offsets = [0, 0, 24], sizes = [2, 8, 3], strides = [1, 1, 1]} : vector<2x8x27xf32> to vector<2x8x3xf32>
    %cst_17 = arith.constant dense<0.000000e+00> : vector<2x8x8xf32>
    %43 = tpu.matmul %40, %41, %cst_17 {dimension_numbers = #tpu.dot_dimension_numbers<[2], [2], [1], [1], [0, 0, 0, 1, 1, 1], [0], [0]>} : vector<2x8x3xf32>, vector<2x8x3xf32>, vector<2x8x8xf32> -> vector<2x8x8xf32>
    %cst_18 = arith.constant dense<0xFF800000> : vector<2x8xf32>
    %44 = vector.multi_reduction <maximumf>, %43, %cst_18 [2] : vector<2x8x8xf32> to vector<2x8xf32>
    %45 = vector.shape_cast %44 : vector<2x8xf32> to vector<2x8x1xf32>
    %46 = vector.broadcast %45 : vector<2x8x1xf32> to vector<2x8x8xf32>
    %47 = arith.subf %43, %46 : vector<2x8x8xf32>
    %48 = math.exp %47 : vector<2x8x8xf32>
    %cst_19 = arith.constant dense<0.000000e+00> : vector<2x8xf32>
    %49 = vector.multi_reduction <add>, %48, %cst_19 [2] : vector<2x8x8xf32> to vector<2x8xf32>
    %50 = vector.shape_cast %49 : vector<2x8xf32> to vector<2x8x1xf32>
    %51 = vector.broadcast %50 : vector<2x8x1xf32> to vector<2x8x8xf32>
    %52 = arith.divf %48, %51 : vector<2x8x8xf32>
    %cst_20 = arith.constant dense<0.000000e+00> : vector<2x8x3xf32>
    %53 = tpu.matmul %52, %42, %cst_20 {dimension_numbers = #tpu.dot_dimension_numbers<[2], [1], [1], [2], [0, 0, 0, 1, 1, 2], [0], [0]>} : vector<2x8x8xf32>, vector<2x8x3xf32>, vector<2x8x3xf32> -> vector<2x8x3xf32>
    %c40 = arith.constant 40 : index
    %c0_21 = arith.constant 0 : index
    %54 = vector.load %arg1[%c40, %c0_21] : memref<56x128xf32, #tpu.memory_space<vmem>>, vector<3x9xf32>
    %cst_22 = arith.constant dense<0.000000e+00> : vector<2x8x9xf32>
    %55 = tpu.matmul %53, %54, %cst_22 {dimension_numbers = #tpu.dot_dimension_numbers<[2], [0], [0, 1], [1], [0, 0, 0, 1, 1, 1], [], []>} : vector<2x8x3xf32>, vector<3x9xf32>, vector<2x8x9xf32> -> vector<2x8x9xf32>
    %56 = arith.addf %39, %55 : vector<2x8x9xf32>
    %c48 = arith.constant 48 : index
    %c0_23 = arith.constant 0 : index
    %57 = vector.load %arg1[%c48, %c0_23] : memref<56x128xf32, #tpu.memory_space<vmem>>, vector<1x9xf32>
    %58 = vector.shape_cast %57 : vector<1x9xf32> to vector<1x1x9xf32>
    %59 = vector.broadcast %58 : vector<1x1x9xf32> to vector<2x8x9xf32>
    %60 = arith.addf %56, %59 : vector<2x8x9xf32>
    %c0_24 = arith.constant 0 : index
    %c0_25 = arith.constant 0 : index
    %c0_26 = arith.constant 0 : index
    %61 = vector.load %arg2[%c0_24, %c0_25, %c0_26] : memref<2x8x9xf32, #tpu.memory_space<vmem>>, vector<2x8x9xf32>
    tpu.vector_store %arg2[%c0_24, %c0_25, %c0_26], %60 {strides = array<i32>} : memref<2x8x9xf32, #tpu.memory_space<vmem>>, vector<2x8x9xf32>,
    return
  }
}

</mosaic_0001>

<llo_original>
// kernel: multi_head_attention.1
$region0: #{multi_head_attention.1}
  #allocation0 [shape = 'u32[]', space=smem, size = 0x4, offset = 0x4, fixed_abs, tag = 'smem constant byte address 0x4 - core index']
  #allocation1 [shape = 'u32[144,128]{1,0:T(1,128)}', space=vmem, size = 0x12000, scoped, tag = 'internal scratch']
  %s0 = inlined_call_operand.hbm [shape: f32[2,8,9], index: 0, kind: input, shape index: {}]
  %s1 = inlined_call_operand.hbm [shape: f32[56,128], index: 1, kind: input, shape index: {}]
  %s2 = inlined_call_operand.hbm [shape: f32[2,8,9], index: 2, kind: output, shape index: {}]
  %s3 = sld [smem:[#allocation0]]
  $region26: #{multi_head_attention.1} parent=0
    _
  %s5 = ssub.s32 1, %s3
  %s6 = scalar_select 0, %s5, %s3
  $region1: #{multi_head_attention.1} parent=0
    #allocation2 [shape = 'u8[8192]{0}', space=vmem, size = 0x2000, scoped, tag = 'input window, operand 0, single buffered']
    #allocation3 [shape = 's32[1]{0}', space=sflag, size = 0x4, scoped, tag = 'scoped memory for multi_head_attention.1']
    #allocation4 [shape = 's32[1]{0}', space=sflag, size = 0x4, scoped, tag = 'scoped memory for multi_head_attention.1']
    #allocation5 [shape = 'u8[28672]{0}', space=vmem, size = 0x7000, scoped, tag = 'input window, operand 1, single buffered']
    #allocation6 [shape = 's32[1]{0}', space=sflag, size = 0x4, scoped, tag = 'scoped memory for multi_head_attention.1']
    #allocation7 [shape = 'u8[8192]{0}', space=vmem, size = 0x2000, scoped, tag = 'output window, operand 0, single buffered']
    %7 = vsyncpa [#allocation3], 0
    %8 = vsyncpa [#allocation6], 0
    %9 = vsyncpa [#allocation4], 0
    // Predicated region
    $region2: #{multi_head_attention.1} parent=1 // pred_check
      _
    $region3: #{multi_head_attention.1} parent=1 // pred_check_branch
      %11 = sbr.rel (0) target = $region5
    $region4: #{multi_head_attention.1} parent=1 // pred_region
      %s13 = ssub.s32 256, 256
      %14 = vsyncadd [#allocation3], %s13
      %s15 = sshll.u32 [#allocation2], 4
      %s16 = int_to_ptr.vmem [resolvable:$true] %s15
      %21 = dma.hbm_to_vmem [thread:$0]  %s0, 256, %s16, [#allocation3], 128, 128, 8
    $region5: #{multi_head_attention.1} parent=1 // pred_fallthru
      _
    // Predicated region
    $region6: #{multi_head_attention.1} parent=1 // pred_check
      _
    $region7: #{multi_head_attention.1} parent=1 // pred_check_branch
      %23 = sbr.rel (0) target = $region9
    $region8: #{multi_head_attention.1} parent=1 // pred_region
      %s25 = ssub.s32 896, 896
      %26 = vsyncadd [#allocation6], %s25
      %s27 = sshll.u32 [#allocation5], 4
      %s28 = int_to_ptr.vmem [resolvable:$true] %s27
      %33 = dma.hbm_to_vmem [thread:$0]  %s1, 896, %s28, [#allocation6], 128, 128, 8
    $region9: #{multi_head_attention.1} parent=1 // pred_fallthru
      _
    // Predicated region
    $region10: #{multi_head_attention.1} parent=1 // pred_check
      _
    $region11: #{multi_head_attention.1} parent=1 // pred_check_branch
      %35 = sbr.rel (0) target = $region13
    $region12: #{multi_head_attention.1} parent=1 // pred_region
      %36 = dma.done [#allocation3], 256
    $region13: #{multi_head_attention.1} parent=1 // pred_fallthru
      _
    // Predicated region
    $region14: #{multi_head_attention.1} parent=1 // pred_check
      _
    $region15: #{multi_head_attention.1} parent=1 // pred_check_branch
      %38 = sbr.rel (0) target = $region17
    $region16: #{multi_head_attention.1} parent=1 // pred_region
      %39 = dma.done [#allocation6], 896
    $region17: #{multi_head_attention.1} parent=1 // pred_fallthru
      _
    %v40 = vld [vmem:[#allocation2] sm:$0xff]
    %v41 = vld [vmem:[#allocation2 + $0x8] sm:$0xff]
    %v42 = vld [vmem:[#allocation5] sm:$0xff]
    %v43 = vld [vmem:[#allocation5 + $0x8] sm:$0x1]
    %v44 = vld [vmem:[#allocation5 + $0x10] sm:$0x1]
    %v45 = vlaneseq
    %v46 = vshrl.u32 %v45, 7
    %v47 = vsub.s32 0, %v46
    %v48 = vrot.slane %v44, %v47
    %vm49 = vcmask 72704
    %v51 = vsel %vm49, %v40, 0
    %v54 = vsel %vm49, %v41, 0
    %vm56 = vcmask 1040384
    %v58 = vsel %vm56, %v43, 0
    %60 = vmatprep.subr.mxu0 0.0
    %61 = vmatpush1.msra.mxu0 %v42
    %62 = vmatprep.subr.mxu0 0.0
    %63 = vmatpush1.msra.mxu0 %v58
    %64 = vmatprep.subr.mxu0 0.0
    %65 = vmatpush1.msra.mxu0 0.0
    %66 = vmatprep.subr.mxu0 0.0
    %67 = vmatpush1.msra.mxu0 0.0
    %68 = vmatprep.subr.mxu0 0.0
    %69 = vmatpush1.msra.mxu0 0.0
    %70 = vmatprep.subr.mxu0 0.0
    %71 = vmatpush1.msra.mxu0 0.0
    %72 = vmatprep.subr.mxu0 0.0
    %73 = vmatpush1.msra.mxu0 0.0
    %74 = vmatprep.subr.mxu0 0.0
    %75 = vmatpush1.msra.mxu0 0.0
    %76 = vmatprep.subr.mxu0 0.0
    %77 = vmatpush1.msra.mxu0 0.0
    %78 = vmatprep.subr.mxu0 0.0
    %79 = vmatpush1.msra.mxu0 0.0
    %80 = vmatprep.subr.mxu0 0.0
    %81 = vmatpush1.msra.mxu0 0.0
    %82 = vmatprep.subr.mxu0 0.0
    %83 = vmatpush1.msra.mxu0 0.0
    %84 = vmatprep.subr.mxu0 0.0
    %85 = vmatpush1.msra.mxu0 0.0
    %86 = vmatprep.subr.mxu0 0.0
    %87 = vmatpush1.msra.mxu0 0.0
    %88 = vmatprep.subr.mxu0 0.0
    %89 = vmatpush1.msra.mxu0 0.0
    %90 = vmatprep.subr.mxu0 0.0
    %91 = vmatpush1.msra.mxu0 0.0
    %92 = vmatprep.subr.mxu0 0.0
    %93 = vmatpush1.msra.mxu0 0.0
    %94 = vmatprep.subr.mxu0 0.0
    %95 = vmatpush1.msra.mxu0 0.0
    %96 = vmatprep.subr.mxu0 0.0
    %97 = vmatpush1.msra.mxu0 0.0
    %98 = vmatprep.subr.mxu0 0.0
    %99 = vmatpush1.msra.mxu0 0.0
    %100 = vmatprep.subr.mxu0 0.0
    %101 = vmatpush1.msra.mxu0 0.0
    %102 = vmatprep.subr.mxu0 0.0
    %103 = vmatpush1.msra.mxu0 0.0
    %104 = vmatprep.subr.mxu0 0.0
    %105 = vmatpush1.msra.mxu0 0.0
    %106 = vmatprep.subr.mxu0 0.0
    %107 = vmatpush1.msra.mxu0 0.0
    %108 = vmatprep.subr.mxu0 0.0
    %109 = vmatpush1.msra.mxu0 0.0
    %110 = vmatprep.subr.mxu0 0.0
    %111 = vmatpush1.msra.mxu0 0.0
    %112 = vmatprep.subr.mxu0 0.0
    %113 = vmatpush1.msra.mxu0 0.0
    %114 = vmatprep.subr.mxu0 0.0
    %115 = vmatpush1.msra.mxu0 0.0
    %116 = vmatprep.subr.mxu0 0.0
    %117 = vmatpush1.msra.mxu0 0.0
    %118 = vmatprep.subr.mxu0 0.0
    %119 = vmatpush1.msra.mxu0 0.0
    %120 = vmatprep.subr.mxu0 0.0
    %121 = vmatpush1.msra.mxu0 0.0
    %122 = vmatprep.subr.mxu0 0.0
    %123 = vmatpush1.msra.mxu0 0.0
    %124 = vmatprep.mubr.f32.mxu0 0.0
    %125 = vmatmul.mubr.f32.gmra.mrb[0].mxu0 %v51
    %v126 = vpop.f32.mrb[0].mxu0
    %v127 = vadd.f32 %v48, %v126
    %v128 = vpop.f32.mrb[0].mxu0
    %129 = vmatprep.mubr.f32.mxu0 0.0
    %130 = vmatmul.mubr.f32.gmra.mrb[0].mxu0 %v54
    %v131 = vpop.f32.mrb[0].mxu0
    %v132 = vadd.f32 %v48, %v131
    %v133 = vpop.f32.mrb[0].mxu0
    %134 = vdwg.mxu0
    %136 = vrot.lane.b32.xlu0 %v127, 119
    %v137 = vpop.permute.xlu0 %136
    %vm138 = vcmask 23552
    %v139 = vsel %vm138, %v127, 0
    %v141 = vsel %vm138, %v137, 0
    %143 = vmatprep.subr.mxu0 0.0
    %144 = vmatpush1.xpose.msra.mxu0 %v141
    %145 = vmatprep.subr.mxu0 0.0
    %146 = vmatpush1.xpose.msra.mxu0 0.0
    %147 = vmatprep.subr.mxu0 0.0
    %148 = vmatpush1.xpose.msra.mxu0 0.0
    %149 = vmatprep.subr.mxu0 0.0
    %150 = vmatpush1.xpose.msra.mxu0 0.0
    %151 = vmatprep.subr.mxu0 0.0
    %152 = vmatpush1.xpose.msra.mxu0 0.0
    %153 = vmatprep.subr.mxu0 0.0
    %154 = vmatpush1.xpose.msra.mxu0 0.0
    %155 = vmatprep.subr.mxu0 0.0
    %156 = vmatpush1.xpose.msra.mxu0 0.0
    %157 = vmatprep.subr.mxu0 0.0
    %158 = vmatpush1.xpose.msra.mxu0 0.0
    %159 = vmatprep.subr.mxu0 0.0
    %160 = vmatpush1.xpose.msra.mxu0 0.0
    %161 = vmatprep.subr.mxu0 0.0
    %162 = vmatpush1.xpose.msra.mxu0 0.0
    %163 = vmatprep.subr.mxu0 0.0
    %164 = vmatpush1.xpose.msra.mxu0 0.0
    %165 = vmatprep.subr.mxu0 0.0
    %166 = vmatpush1.xpose.msra.mxu0 0.0
    %167 = vmatprep.subr.mxu0 0.0
    %168 = vmatpush1.xpose.msra.mxu0 0.0
    %169 = vmatprep.subr.mxu0 0.0
    %170 = vmatpush1.xpose.msra.mxu0 0.0
    %171 = vmatprep.subr.mxu0 0.0
    %172 = vmatpush1.xpose.msra.mxu0 0.0
    %173 = vmatprep.subr.mxu0 0.0
    %174 = vmatpush1.xpose.msra.mxu0 0.0
    %175 = vmatprep.subr.mxu0 0.0
    %176 = vmatpush1.xpose.msra.mxu0 0.0
    %177 = vmatprep.subr.mxu0 0.0
    %178 = vmatpush1.xpose.msra.mxu0 0.0
    %179 = vmatprep.subr.mxu0 0.0
    %180 = vmatpush1.xpose.msra.mxu0 0.0
    %181 = vmatprep.subr.mxu0 0.0
    %182 = vmatpush1.xpose.msra.mxu0 0.0
    %183 = vmatprep.subr.mxu0 0.0
    %184 = vmatpush1.xpose.msra.mxu0 0.0
    %185 = vmatprep.subr.mxu0 0.0
    %186 = vmatpush1.xpose.msra.mxu0 0.0
    %187 = vmatprep.subr.mxu0 0.0
    %188 = vmatpush1.xpose.msra.mxu0 0.0
    %189 = vmatprep.subr.mxu0 0.0
    %190 = vmatpush1.xpose.msra.mxu0 0.0
    %191 = vmatprep.subr.mxu0 0.0
    %192 = vmatpush1.xpose.msra.mxu0 0.0
    %193 = vmatprep.subr.mxu0 0.0
    %194 = vmatpush1.xpose.msra.mxu0 0.0
    %195 = vmatprep.subr.mxu0 0.0
    %196 = vmatpush1.xpose.msra.mxu0 0.0
    %197 = vmatprep.subr.mxu0 0.0
    %198 = vmatpush1.xpose.msra.mxu0 0.0
    %199 = vmatprep.subr.mxu0 0.0
    %200 = vmatpush1.xpose.msra.mxu0 0.0
    %201 = vmatprep.subr.mxu0 0.0
    %202 = vmatpush1.xpose.msra.mxu0 0.0
    %203 = vmatprep.subr.mxu0 0.0
    %204 = vmatpush1.xpose.msra.mxu0 0.0
    %205 = vmatprep.subr.mxu0 0.0
    %206 = vmatpush1.xpose.msra.mxu0 0.0
    %207 = vmatprep.mubr.f32.mxu0 0.0
    %208 = vmatmul.mubr.f32.gmra.mrb[0].mxu0 %v139
    %v209 = vpop.f32.mrb[0].mxu0
    %v210 = vadd.f32 0.0, %v209
    %v211 = vpop.f32.mrb[0].mxu0
    %212 = vdwg.mxu0
    %214 = vrot.lane.b32.xlu0 %v132, 119
    %v215 = vpop.permute.xlu0 %214
    %v216 = vsel %vm138, %v132, 0
    %v218 = vsel %vm138, %v215, 0
    %220 = vmatprep.subr.mxu0 0.0
    %221 = vmatpush1.xpose.msra.mxu0 %v218
    %222 = vmatprep.subr.mxu0 0.0
    %223 = vmatpush1.xpose.msra.mxu0 0.0
    %224 = vmatprep.subr.mxu0 0.0
    %225 = vmatpush1.xpose.msra.mxu0 0.0
    %226 = vmatprep.subr.mxu0 0.0
    %227 = vmatpush1.xpose.msra.mxu0 0.0
    %228 = vmatprep.subr.mxu0 0.0
    %229 = vmatpush1.xpose.msra.mxu0 0.0
    %230 = vmatprep.subr.mxu0 0.0
    %231 = vmatpush1.xpose.msra.mxu0 0.0
    %232 = vmatprep.subr.mxu0 0.0
    %233 = vmatpush1.xpose.msra.mxu0 0.0
    %234 = vmatprep.subr.mxu0 0.0
    %235 = vmatpush1.xpose.msra.mxu0 0.0
    %236 = vmatprep.subr.mxu0 0.0
    %237 = vmatpush1.xpose.msra.mxu0 0.0
    %238 = vmatprep.subr.mxu0 0.0
    %239 = vmatpush1.xpose.msra.mxu0 0.0
    %240 = vmatprep.subr.mxu0 0.0
    %241 = vmatpush1.xpose.msra.mxu0 0.0
    %242 = vmatprep.subr.mxu0 0.0
    %243 = vmatpush1.xpose.msra.mxu0 0.0
    %244 = vmatprep.subr.mxu0 0.0
    %245 = vmatpush1.xpose.msra.mxu0 0.0
    %246 = vmatprep.subr.mxu0 0.0
    %247 = vmatpush1.xpose.msra.mxu0 0.0
    %248 = vmatprep.subr.mxu0 0.0
    %249 = vmatpush1.xpose.msra.mxu0 0.0
    %250 = vmatprep.subr.mxu0 0.0
    %251 = vmatpush1.xpose.msra.mxu0 0.0
    %252 = vmatprep.subr.mxu0 0.0
    %253 = vmatpush1.xpose.msra.mxu0 0.0
    %254 = vmatprep.subr.mxu0 0.0
    %255 = vmatpush1.xpose.msra.mxu0 0.0
    %256 = vmatprep.subr.mxu0 0.0
    %257 = vmatpush1.xpose.msra.mxu0 0.0
    %258 = vmatprep.subr.mxu0 0.0
    %259 = vmatpush1.xpose.msra.mxu0 0.0
    %260 = vmatprep.subr.mxu0 0.0
    %261 = vmatpush1.xpose.msra.mxu0 0.0
    %262 = vmatprep.subr.mxu0 0.0
    %263 = vmatpush1.xpose.msra.mxu0 0.0
    %264 = vmatprep.subr.mxu0 0.0
    %265 = vmatpush1.xpose.msra.mxu0 0.0
    %266 = vmatprep.subr.mxu0 0.0
    %267 = vmatpush1.xpose.msra.mxu0 0.0
    %268 = vmatprep.subr.mxu0 0.0
    %269 = vmatpush1.xpose.msra.mxu0 0.0
    %270 = vmatprep.subr.mxu0 0.0
    %271 = vmatpush1.xpose.msra.mxu0 0.0
    %272 = vmatprep.subr.mxu0 0.0
    %273 = vmatpush1.xpose.msra.mxu0 0.0
    %274 = vmatprep.subr.mxu0 0.0
    %275 = vmatpush1.xpose.msra.mxu0 0.0
    %276 = vmatprep.subr.mxu0 0.0
    %277 = vmatpush1.xpose.msra.mxu0 0.0
    %278 = vmatprep.subr.mxu0 0.0
    %279 = vmatpush1.xpose.msra.mxu0 0.0
    %280 = vmatprep.subr.mxu0 0.0
    %281 = vmatpush1.xpose.msra.mxu0 0.0
    %282 = vmatprep.subr.mxu0 0.0
    %283 = vmatpush1.xpose.msra.mxu0 0.0
    %284 = vmatprep.mubr.f32.mxu0 0.0
    %285 = vmatmul.mubr.f32.gmra.mrb[0].mxu0 %v216
    %v286 = vpop.f32.mrb[0].mxu0
    %v287 = vadd.f32 0.0, %v286
    %v288 = vpop.f32.mrb[0].mxu0
    %289 = vdwg.mxu0
    %vm290 = vcmask 64512
    %v291 = vsel %vm290, %v210, -inf
    %292 = vmax.xlane.f32.xlu0 %v291
    %v293 = vpop.xlane.xlu0 %292
    %v294 = vsel %vm290, %v287, -inf
    %295 = vmax.xlane.f32.xlu0 %v294
    %v296 = vpop.xlane.xlu0 %295
    %v297 = vsub.f32 %v210, %v293
    %v298 = vsub.f32 %v287, %v296
    %v299 = vmul.f32 %v297, 1.442695
    %v300 = vpow.pop %v299
    %v301 = vmul.f32 %v298, 1.442695
    %v302 = vpow.pop %v301
    %v303 = vsel %vm290, %v300, 0.0
    %304 = vadd.xlane.f32.xlu0 %v303
    %v305 = vpop.xlane.xlu0 %304
    %v306 = vsel %vm290, %v302, 0.0
    %307 = vadd.xlane.f32.xlu0 %v306
    %v308 = vpop.xlane.xlu0 %307
    %v309 = vrcp.pop %v305
    %v310 = vmul.f32 %v300, %v309
    %v311 = vrcp.pop %v308
    %v312 = vmul.f32 %v302, %v311
    %313 = vrot.lane.b32.xlu0 %v127, 110
    %v314 = vpop.permute.xlu0 %313
    %v317 = vsel %vm290, %v310, 0
    %319 = vmatprep.subr.mxu0 0.0
    %320 = vmatpush1.msra.mxu0 %v314
    %321 = vmatprep.subr.mxu0 0.0
    %322 = vmatpush1.msra.mxu0 0.0
    %323 = vmatprep.subr.mxu0 0.0
    %324 = vmatpush1.msra.mxu0 0.0
    %325 = vmatprep.subr.mxu0 0.0
    %326 = vmatpush1.msra.mxu0 0.0
    %327 = vmatprep.subr.mxu0 0.0
    %328 = vmatpush1.msra.mxu0 0.0
    %329 = vmatprep.subr.mxu0 0.0
    %330 = vmatpush1.msra.mxu0 0.0
    %331 = vmatprep.subr.mxu0 0.0
    %332 = vmatpush1.msra.mxu0 0.0
    %333 = vmatprep.subr.mxu0 0.0
    %334 = vmatpush1.msra.mxu0 0.0
    %335 = vmatprep.subr.mxu0 0.0
    %336 = vmatpush1.msra.mxu0 0.0
    %337 = vmatprep.subr.mxu0 0.0
    %338 = vmatpush1.msra.mxu0 0.0
    %339 = vmatprep.subr.mxu0 0.0
    %340 = vmatpush1.msra.mxu0 0.0
    %341 = vmatprep.subr.mxu0 0.0
    %342 = vmatpush1.msra.mxu0 0.0
    %343 = vmatprep.subr.mxu0 0.0
    %344 = vmatpush1.msra.mxu0 0.0
    %345 = vmatprep.subr.mxu0 0.0
    %346 = vmatpush1.msra.mxu0 0.0
    %347 = vmatprep.subr.mxu0 0.0
    %348 = vmatpush1.msra.mxu0 0.0
    %349 = vmatprep.subr.mxu0 0.0
    %350 = vmatpush1.msra.mxu0 0.0
    %351 = vmatprep.subr.mxu0 0.0
    %352 = vmatpush1.msra.mxu0 0.0
    %353 = vmatprep.subr.mxu0 0.0
    %354 = vmatpush1.msra.mxu0 0.0
    %355 = vmatprep.subr.mxu0 0.0
    %356 = vmatpush1.msra.mxu0 0.0
    %357 = vmatprep.subr.mxu0 0.0
    %358 = vmatpush1.msra.mxu0 0.0
    %359 = vmatprep.subr.mxu0 0.0
    %360 = vmatpush1.msra.mxu0 0.0
    %361 = vmatprep.subr.mxu0 0.0
    %362 = vmatpush1.msra.mxu0 0.0
    %363 = vmatprep.subr.mxu0 0.0
    %364 = vmatpush1.msra.mxu0 0.0
    %365 = vmatprep.subr.mxu0 0.0
    %366 = vmatpush1.msra.mxu0 0.0
    %367 = vmatprep.subr.mxu0 0.0
    %368 = vmatpush1.msra.mxu0 0.0
    %369 = vmatprep.subr.mxu0 0.0
    %370 = vmatpush1.msra.mxu0 0.0
    %371 = vmatprep.subr.mxu0 0.0
    %372 = vmatpush1.msra.mxu0 0.0
    %373 = vmatprep.subr.mxu0 0.0
    %374 = vmatpush1.msra.mxu0 0.0
    %375 = vmatprep.subr.mxu0 0.0
    %376 = vmatpush1.msra.mxu0 0.0
    %377 = vmatprep.subr.mxu0 0.0
    %378 = vmatpush1.msra.mxu0 0.0
    %379 = vmatprep.subr.mxu0 0.0
    %380 = vmatpush1.msra.mxu0 0.0
    %381 = vmatprep.subr.mxu0 0.0
    %382 = vmatpush1.msra.mxu0 0.0
    %383 = vmatprep.mubr.f32.mxu0 0.0
    %384 = vmatmul.mubr.f32.gmra.mrb[0].mxu0 %v317
    %v385 = vpop.f32.mrb[0].mxu0
    %v386 = vadd.f32 0.0, %v385
    %v387 = vpop.f32.mrb[0].mxu0
    %388 = vdwg.mxu0
    %389 = vrot.lane.b32.xlu0 %v132, 110
    %v390 = vpop.permute.xlu0 %389
    %v393 = vsel %vm290, %v312, 0
    %395 = vmatprep.subr.mxu0 0.0
    %396 = vmatpush1.msra.mxu0 %v390
    %397 = vmatprep.subr.mxu0 0.0
    %398 = vmatpush1.msra.mxu0 0.0
    %399 = vmatprep.subr.mxu0 0.0
    %400 = vmatpush1.msra.mxu0 0.0
    %401 = vmatprep.subr.mxu0 0.0
    %402 = vmatpush1.msra.mxu0 0.0
    %403 = vmatprep.subr.mxu0 0.0
    %404 = vmatpush1.msra.mxu0 0.0
    %405 = vmatprep.subr.mxu0 0.0
    %406 = vmatpush1.msra.mxu0 0.0
    %407 = vmatprep.subr.mxu0 0.0
    %408 = vmatpush1.msra.mxu0 0.0
    %409 = vmatprep.subr.mxu0 0.0
    %410 = vmatpush1.msra.mxu0 0.0
    %411 = vmatprep.subr.mxu0 0.0
    %412 = vmatpush1.msra.mxu0 0.0
    %413 = vmatprep.subr.mxu0 0.0
    %414 = vmatpush1.msra.mxu0 0.0
    %415 = vmatprep.subr.mxu0 0.0
    %416 = vmatpush1.msra.mxu0 0.0
    %417 = vmatprep.subr.mxu0 0.0
    %418 = vmatpush1.msra.mxu0 0.0
    %419 = vmatprep.subr.mxu0 0.0
    %420 = vmatpush1.msra.mxu0 0.0
    %421 = vmatprep.subr.mxu0 0.0
    %422 = vmatpush1.msra.mxu0 0.0
    %423 = vmatprep.subr.mxu0 0.0
    %424 = vmatpush1.msra.mxu0 0.0
    %425 = vmatprep.subr.mxu0 0.0
    %426 = vmatpush1.msra.mxu0 0.0
    %427 = vmatprep.subr.mxu0 0.0
    %428 = vmatpush1.msra.mxu0 0.0
    %429 = vmatprep.subr.mxu0 0.0
    %430 = vmatpush1.msra.mxu0 0.0
    %431 = vmatprep.subr.mxu0 0.0
    %432 = vmatpush1.msra.mxu0 0.0
    %433 = vmatprep.subr.mxu0 0.0
    %434 = vmatpush1.msra.mxu0 0.0
    %435 = vmatprep.subr.mxu0 0.0
    %436 = vmatpush1.msra.mxu0 0.0
    %437 = vmatprep.subr.mxu0 0.0
    %438 = vmatpush1.msra.mxu0 0.0
    %439 = vmatprep.subr.mxu0 0.0
    %440 = vmatpush1.msra.mxu0 0.0
    %441 = vmatprep.subr.mxu0 0.0
    %442 = vmatpush1.msra.mxu0 0.0
    %443 = vmatprep.subr.mxu0 0.0
    %444 = vmatpush1.msra.mxu0 0.0
    %445 = vmatprep.subr.mxu0 0.0
    %446 = vmatpush1.msra.mxu0 0.0
    %447 = vmatprep.subr.mxu0 0.0
    %448 = vmatpush1.msra.mxu0 0.0
    %449 = vmatprep.subr.mxu0 0.0
    %450 = vmatpush1.msra.mxu0 0.0
    %451 = vmatprep.subr.mxu0 0.0
    %452 = vmatpush1.msra.mxu0 0.0
    %453 = vmatprep.subr.mxu0 0.0
    %454 = vmatpush1.msra.mxu0 0.0
    %455 = vmatprep.subr.mxu0 0.0
    %456 = vmatpush1.msra.mxu0 0.0
    %457 = vmatprep.subr.mxu0 0.0
    %458 = vmatpush1.msra.mxu0 0.0
    %459 = vmatprep.mubr.f32.mxu0 0.0
    %460 = vmatmul.mubr.f32.gmra.mrb[0].mxu0 %v393
    %v461 = vpop.f32.mrb[0].mxu0
    %v462 = vadd.f32 0.0, %v461
    %v463 = vpop.f32.mrb[0].mxu0
    %464 = vdwg.mxu0
    %v465 = vld [vmem:[#allocation5 + $0x18] sm:$0x7]
    %466 = vrot.lane.b32.xlu0 %v127, 125
    %v467 = vpop.permute.xlu0 %466
    %468 = vrot.lane.b32.xlu0 %v127, 116
    %v469 = vpop.permute.xlu0 %468
    %v470 = vsel %vm138, %v467, 0
    %v472 = vsel %vm138, %v469, 0
    %474 = vmatprep.subr.mxu0 0.0
    %475 = vmatpush1.xpose.msra.mxu0 %v472
    %476 = vmatprep.subr.mxu0 0.0
    %477 = vmatpush1.xpose.msra.mxu0 0.0
    %478 = vmatprep.subr.mxu0 0.0
    %479 = vmatpush1.xpose.msra.mxu0 0.0
    %480 = vmatprep.subr.mxu0 0.0
    %481 = vmatpush1.xpose.msra.mxu0 0.0
    %482 = vmatprep.subr.mxu0 0.0
    %483 = vmatpush1.xpose.msra.mxu0 0.0
    %484 = vmatprep.subr.mxu0 0.0
    %485 = vmatpush1.xpose.msra.mxu0 0.0
    %486 = vmatprep.subr.mxu0 0.0
    %487 = vmatpush1.xpose.msra.mxu0 0.0
    %488 = vmatprep.subr.mxu0 0.0
    %489 = vmatpush1.xpose.msra.mxu0 0.0
    %490 = vmatprep.subr.mxu0 0.0
    %491 = vmatpush1.xpose.msra.mxu0 0.0
    %492 = vmatprep.subr.mxu0 0.0
    %493 = vmatpush1.xpose.msra.mxu0 0.0
    %494 = vmatprep.subr.mxu0 0.0
    %495 = vmatpush1.xpose.msra.mxu0 0.0
    %496 = vmatprep.subr.mxu0 0.0
    %497 = vmatpush1.xpose.msra.mxu0 0.0
    %498 = vmatprep.subr.mxu0 0.0
    %499 = vmatpush1.xpose.msra.mxu0 0.0
    %500 = vmatprep.subr.mxu0 0.0
    %501 = vmatpush1.xpose.msra.mxu0 0.0
    %502 = vmatprep.subr.mxu0 0.0
    %503 = vmatpush1.xpose.msra.mxu0 0.0
    %504 = vmatprep.subr.mxu0 0.0
    %505 = vmatpush1.xpose.msra.mxu0 0.0
    %506 = vmatprep.subr.mxu0 0.0
    %507 = vmatpush1.xpose.msra.mxu0 0.0
    %508 = vmatprep.subr.mxu0 0.0
    %509 = vmatpush1.xpose.msra.mxu0 0.0
    %510 = vmatprep.subr.mxu0 0.0
    %511 = vmatpush1.xpose.msra.mxu0 0.0
    %512 = vmatprep.subr.mxu0 0.0
    %513 = vmatpush1.xpose.msra.mxu0 0.0
    %514 = vmatprep.subr.mxu0 0.0
    %515 = vmatpush1.xpose.msra.mxu0 0.0
    %516 = vmatprep.subr.mxu0 0.0
    %517 = vmatpush1.xpose.msra.mxu0 0.0
    %518 = vmatprep.subr.mxu0 0.0
    %519 = vmatpush1.xpose.msra.mxu0 0.0
    %520 = vmatprep.subr.mxu0 0.0
    %521 = vmatpush1.xpose.msra.mxu0 0.0
    %522 = vmatprep.subr.mxu0 0.0
    %523 = vmatpush1.xpose.msra.mxu0 0.0
    %524 = vmatprep.subr.mxu0 0.0
    %525 = vmatpush1.xpose.msra.mxu0 0.0
    %526 = vmatprep.subr.mxu0 0.0
    %527 = vmatpush1.xpose.msra.mxu0 0.0
    %528 = vmatprep.subr.mxu0 0.0
    %529 = vmatpush1.xpose.msra.mxu0 0.0
    %530 = vmatprep.subr.mxu0 0.0
    %531 = vmatpush1.xpose.msra.mxu0 0.0
    %532 = vmatprep.subr.mxu0 0.0
    %533 = vmatpush1.xpose.msra.mxu0 0.0
    %534 = vmatprep.subr.mxu0 0.0
    %535 = vmatpush1.xpose.msra.mxu0 0.0
    %536 = vmatprep.subr.mxu0 0.0
    %537 = vmatpush1.xpose.msra.mxu0 0.0
    %538 = vmatprep.mubr.f32.mxu0 0.0
    %539 = vmatmul.mubr.f32.gmra.mrb[0].mxu0 %v470
    %v540 = vpop.f32.mrb[0].mxu0
    %v541 = vadd.f32 0.0, %v540
    %v542 = vpop.f32.mrb[0].mxu0
    %543 = vdwg.mxu0
    %544 = vrot.lane.b32.xlu0 %v132, 125
    %v545 = vpop.permute.xlu0 %544
    %546 = vrot.lane.b32.xlu0 %v132, 116
    %v547 = vpop.permute.xlu0 %546
    %v548 = vsel %vm138, %v545, 0
    %v550 = vsel %vm138, %v547, 0
    %552 = vmatprep.subr.mxu0 0.0
    %553 = vmatpush1.xpose.msra.mxu0 %v550
    %554 = vmatprep.subr.mxu0 0.0
    %555 = vmatpush1.xpose.msra.mxu0 0.0
    %556 = vmatprep.subr.mxu0 0.0
    %557 = vmatpush1.xpose.msra.mxu0 0.0
    %558 = vmatprep.subr.mxu0 0.0
    %559 = vmatpush1.xpose.msra.mxu0 0.0
    %560 = vmatprep.subr.mxu0 0.0
    %561 = vmatpush1.xpose.msra.mxu0 0.0
    %562 = vmatprep.subr.mxu0 0.0
    %563 = vmatpush1.xpose.msra.mxu0 0.0
    %564 = vmatprep.subr.mxu0 0.0
    %565 = vmatpush1.xpose.msra.mxu0 0.0
    %566 = vmatprep.subr.mxu0 0.0
    %567 = vmatpush1.xpose.msra.mxu0 0.0
    %568 = vmatprep.subr.mxu0 0.0
    %569 = vmatpush1.xpose.msra.mxu0 0.0
    %570 = vmatprep.subr.mxu0 0.0
    %571 = vmatpush1.xpose.msra.mxu0 0.0
    %572 = vmatprep.subr.mxu0 0.0
    %573 = vmatpush1.xpose.msra.mxu0 0.0
    %574 = vmatprep.subr.mxu0 0.0
    %575 = vmatpush1.xpose.msra.mxu0 0.0
    %576 = vmatprep.subr.mxu0 0.0
    %577 = vmatpush1.xpose.msra.mxu0 0.0
    %578 = vmatprep.subr.mxu0 0.0
    %579 = vmatpush1.xpose.msra.mxu0 0.0
    %580 = vmatprep.subr.mxu0 0.0
    %581 = vmatpush1.xpose.msra.mxu0 0.0
    %582 = vmatprep.subr.mxu0 0.0
    %583 = vmatpush1.xpose.msra.mxu0 0.0
    %584 = vmatprep.subr.mxu0 0.0
    %585 = vmatpush1.xpose.msra.mxu0 0.0
    %586 = vmatprep.subr.mxu0 0.0
    %587 = vmatpush1.xpose.msra.mxu0 0.0
    %588 = vmatprep.subr.mxu0 0.0
    %589 = vmatpush1.xpose.msra.mxu0 0.0
    %590 = vmatprep.subr.mxu0 0.0
    %591 = vmatpush1.xpose.msra.mxu0 0.0
    %592 = vmatprep.subr.mxu0 0.0
    %593 = vmatpush1.xpose.msra.mxu0 0.0
    %594 = vmatprep.subr.mxu0 0.0
    %595 = vmatpush1.xpose.msra.mxu0 0.0
    %596 = vmatprep.subr.mxu0 0.0
    %597 = vmatpush1.xpose.msra.mxu0 0.0
    %598 = vmatprep.subr.mxu0 0.0
    %599 = vmatpush1.xpose.msra.mxu0 0.0
    %600 = vmatprep.subr.mxu0 0.0
    %601 = vmatpush1.xpose.msra.mxu0 0.0
    %602 = vmatprep.subr.mxu0 0.0
    %603 = vmatpush1.xpose.msra.mxu0 0.0
    %604 = vmatprep.subr.mxu0 0.0
    %605 = vmatpush1.xpose.msra.mxu0 0.0
    %606 = vmatprep.subr.mxu0 0.0
    %607 = vmatpush1.xpose.msra.mxu0 0.0
    %608 = vmatprep.subr.mxu0 0.0
    %609 = vmatpush1.xpose.msra.mxu0 0.0
    %610 = vmatprep.subr.mxu0 0.0
    %611 = vmatpush1.xpose.msra.mxu0 0.0
    %612 = vmatprep.subr.mxu0 0.0
    %613 = vmatpush1.xpose.msra.mxu0 0.0
    %614 = vmatprep.subr.mxu0 0.0
    %615 = vmatpush1.xpose.msra.mxu0 0.0
    %616 = vmatprep.mubr.f32.mxu0 0.0
    %617 = vmatmul.mubr.f32.gmra.mrb[0].mxu0 %v548
    %v618 = vpop.f32.mrb[0].mxu0
    %v619 = vadd.f32 0.0, %v618
    %v620 = vpop.f32.mrb[0].mxu0
    %621 = vdwg.mxu0
    %v622 = vsel %vm290, %v541, -inf
    %623 = vmax.xlane.f32.xlu0 %v622
    %v624 = vpop.xlane.xlu0 %623
    %v625 = vsel %vm290, %v619, -inf
    %626 = vmax.xlane.f32.xlu0 %v625
    %v627 = vpop.xlane.xlu0 %626
    %v628 = vsub.f32 %v541, %v624
    %v629 = vsub.f32 %v619, %v627
    %v630 = vmul.f32 %v628, 1.442695
    %v631 = vpow.pop %v630
    %v632 = vmul.f32 %v629, 1.442695
    %v633 = vpow.pop %v632
    %v634 = vsel %vm290, %v631, 0.0
    %635 = vadd.xlane.f32.xlu0 %v634
    %v636 = vpop.xlane.xlu0 %635
    %v637 = vsel %vm290, %v633, 0.0
    %638 = vadd.xlane.f32.xlu0 %v637
    %v639 = vpop.xlane.xlu0 %638
    %v640 = vrcp.pop %v636
    %v641 = vmul.f32 %v631, %v640
    %v642 = vrcp.pop %v639
    %v643 = vmul.f32 %v633, %v642
    %644 = vrot.lane.b32.xlu0 %v127, 107
    %v645 = vpop.permute.xlu0 %644
    %v648 = vsel %vm290, %v641, 0
    %650 = vmatprep.subr.mxu0 0.0
    %651 = vmatpush1.msra.mxu0 %v645
    %652 = vmatprep.subr.mxu0 0.0
    %653 = vmatpush1.msra.mxu0 0.0
    %654 = vmatprep.subr.mxu0 0.0
    %655 = vmatpush1.msra.mxu0 0.0
    %656 = vmatprep.subr.mxu0 0.0
    %657 = vmatpush1.msra.mxu0 0.0
    %658 = vmatprep.subr.mxu0 0.0
    %659 = vmatpush1.msra.mxu0 0.0
    %660 = vmatprep.subr.mxu0 0.0
    %661 = vmatpush1.msra.mxu0 0.0
    %662 = vmatprep.subr.mxu0 0.0
    %663 = vmatpush1.msra.mxu0 0.0
    %664 = vmatprep.subr.mxu0 0.0
    %665 = vmatpush1.msra.mxu0 0.0
    %666 = vmatprep.subr.mxu0 0.0
    %667 = vmatpush1.msra.mxu0 0.0
    %668 = vmatprep.subr.mxu0 0.0
    %669 = vmatpush1.msra.mxu0 0.0
    %670 = vmatprep.subr.mxu0 0.0
    %671 = vmatpush1.msra.mxu0 0.0
    %672 = vmatprep.subr.mxu0 0.0
    %673 = vmatpush1.msra.mxu0 0.0
    %674 = vmatprep.subr.mxu0 0.0
    %675 = vmatpush1.msra.mxu0 0.0
    %676 = vmatprep.subr.mxu0 0.0
    %677 = vmatpush1.msra.mxu0 0.0
    %678 = vmatprep.subr.mxu0 0.0
    %679 = vmatpush1.msra.mxu0 0.0
    %680 = vmatprep.subr.mxu0 0.0
    %681 = vmatpush1.msra.mxu0 0.0
    %682 = vmatprep.subr.mxu0 0.0
    %683 = vmatpush1.msra.mxu0 0.0
    %684 = vmatprep.subr.mxu0 0.0
    %685 = vmatpush1.msra.mxu0 0.0
    %686 = vmatprep.subr.mxu0 0.0
    %687 = vmatpush1.msra.mxu0 0.0
    %688 = vmatprep.subr.mxu0 0.0
    %689 = vmatpush1.msra.mxu0 0.0
    %690 = vmatprep.subr.mxu0 0.0
    %691 = vmatpush1.msra.mxu0 0.0
    %692 = vmatprep.subr.mxu0 0.0
    %693 = vmatpush1.msra.mxu0 0.0
    %694 = vmatprep.subr.mxu0 0.0
    %695 = vmatpush1.msra.mxu0 0.0
    %696 = vmatprep.subr.mxu0 0.0
    %697 = vmatpush1.msra.mxu0 0.0
    %698 = vmatprep.subr.mxu0 0.0
    %699 = vmatpush1.msra.mxu0 0.0
    %700 = vmatprep.subr.mxu0 0.0
    %701 = vmatpush1.msra.mxu0 0.0
    %702 = vmatprep.subr.mxu0 0.0
    %703 = vmatpush1.msra.mxu0 0.0
    %704 = vmatprep.subr.mxu0 0.0
    %705 = vmatpush1.msra.mxu0 0.0
    %706 = vmatprep.subr.mxu0 0.0
    %707 = vmatpush1.msra.mxu0 0.0
    %708 = vmatprep.subr.mxu0 0.0
    %709 = vmatpush1.msra.mxu0 0.0
    %710 = vmatprep.subr.mxu0 0.0
    %711 = vmatpush1.msra.mxu0 0.0
    %712 = vmatprep.subr.mxu0 0.0
    %713 = vmatpush1.msra.mxu0 0.0
    %714 = vmatprep.mubr.f32.mxu0 0.0
    %715 = vmatmul.mubr.f32.gmra.mrb[0].mxu0 %v648
    %v716 = vpop.f32.mrb[0].mxu0
    %v717 = vadd.f32 0.0, %v716
    %v718 = vpop.f32.mrb[0].mxu0
    %719 = vdwg.mxu0
    %720 = vrot.lane.b32.xlu0 %v132, 107
    %v721 = vpop.permute.xlu0 %720
    %v724 = vsel %vm290, %v643, 0
    %726 = vmatprep.subr.mxu0 0.0
    %727 = vmatpush1.msra.mxu0 %v721
    %728 = vmatprep.subr.mxu0 0.0
    %729 = vmatpush1.msra.mxu0 0.0
    %730 = vmatprep.subr.mxu0 0.0
    %731 = vmatpush1.msra.mxu0 0.0
    %732 = vmatprep.subr.mxu0 0.0
    %733 = vmatpush1.msra.mxu0 0.0
    %734 = vmatprep.subr.mxu0 0.0
    %735 = vmatpush1.msra.mxu0 0.0
    %736 = vmatprep.subr.mxu0 0.0
    %737 = vmatpush1.msra.mxu0 0.0
    %738 = vmatprep.subr.mxu0 0.0
    %739 = vmatpush1.msra.mxu0 0.0
    %740 = vmatprep.subr.mxu0 0.0
    %741 = vmatpush1.msra.mxu0 0.0
    %742 = vmatprep.subr.mxu0 0.0
    %743 = vmatpush1.msra.mxu0 0.0
    %744 = vmatprep.subr.mxu0 0.0
    %745 = vmatpush1.msra.mxu0 0.0
    %746 = vmatprep.subr.mxu0 0.0
    %747 = vmatpush1.msra.mxu0 0.0
    %748 = vmatprep.subr.mxu0 0.0
    %749 = vmatpush1.msra.mxu0 0.0
    %750 = vmatprep.subr.mxu0 0.0
    %751 = vmatpush1.msra.mxu0 0.0
    %752 = vmatprep.subr.mxu0 0.0
    %753 = vmatpush1.msra.mxu0 0.0
    %754 = vmatprep.subr.mxu0 0.0
    %755 = vmatpush1.msra.mxu0 0.0
    %756 = vmatprep.subr.mxu0 0.0
    %757 = vmatpush1.msra.mxu0 0.0
    %758 = vmatprep.subr.mxu0 0.0
    %759 = vmatpush1.msra.mxu0 0.0
    %760 = vmatprep.subr.mxu0 0.0
    %761 = vmatpush1.msra.mxu0 0.0
    %762 = vmatprep.subr.mxu0 0.0
    %763 = vmatpush1.msra.mxu0 0.0
    %764 = vmatprep.subr.mxu0 0.0
    %765 = vmatpush1.msra.mxu0 0.0
    %766 = vmatprep.subr.mxu0 0.0
    %767 = vmatpush1.msra.mxu0 0.0
    %768 = vmatprep.subr.mxu0 0.0
    %769 = vmatpush1.msra.mxu0 0.0
    %770 = vmatprep.subr.mxu0 0.0
    %771 = vmatpush1.msra.mxu0 0.0
    %772 = vmatprep.subr.mxu0 0.0
    %773 = vmatpush1.msra.mxu0 0.0
    %774 = vmatprep.subr.mxu0 0.0
    %775 = vmatpush1.msra.mxu0 0.0
    %776 = vmatprep.subr.mxu0 0.0
    %777 = vmatpush1.msra.mxu0 0.0
    %778 = vmatprep.subr.mxu0 0.0
    %779 = vmatpush1.msra.mxu0 0.0
    %780 = vmatprep.subr.mxu0 0.0
    %781 = vmatpush1.msra.mxu0 0.0
    %782 = vmatprep.subr.mxu0 0.0
    %783 = vmatpush1.msra.mxu0 0.0
    %784 = vmatprep.subr.mxu0 0.0
    %785 = vmatpush1.msra.mxu0 0.0
    %786 = vmatprep.subr.mxu0 0.0
    %787 = vmatpush1.msra.mxu0 0.0
    %788 = vmatprep.subr.mxu0 0.0
    %789 = vmatpush1.msra.mxu0 0.0
    %790 = vmatprep.mubr.f32.mxu0 0.0
    %791 = vmatmul.mubr.f32.gmra.mrb[0].mxu0 %v724
    %v792 = vpop.f32.mrb[0].mxu0
    %v793 = vadd.f32 0.0, %v792
    %v794 = vpop.f32.mrb[0].mxu0
    %795 = vdwg.mxu0
    %v796 = vld [vmem:[#allocation5 + $0x20] sm:$0x7]
    %v798 = vsel %vm138, %v717, 0
    %v801 = vsel %vm138, %v793, 0
    %vm803 = vcmask 1042432
    %v805 = vsel %vm803, %v796, 0
    %807 = vmatprep.subr.mxu0 0.0
    %808 = vmatpush1.msra.mxu0 %v805
    %809 = vmatprep.subr.mxu0 0.0
    %810 = vmatpush1.msra.mxu0 0.0
    %811 = vmatprep.subr.mxu0 0.0
    %812 = vmatpush1.msra.mxu0 0.0
    %813 = vmatprep.subr.mxu0 0.0
    %814 = vmatpush1.msra.mxu0 0.0
    %815 = vmatprep.subr.mxu0 0.0
    %816 = vmatpush1.msra.mxu0 0.0
    %817 = vmatprep.subr.mxu0 0.0
    %818 = vmatpush1.msra.mxu0 0.0
    %819 = vmatprep.subr.mxu0 0.0
    %820 = vmatpush1.msra.mxu0 0.0
    %821 = vmatprep.subr.mxu0 0.0
    %822 = vmatpush1.msra.mxu0 0.0
    %823 = vmatprep.subr.mxu0 0.0
    %824 = vmatpush1.msra.mxu0 0.0
    %825 = vmatprep.subr.mxu0 0.0
    %826 = vmatpush1.msra.mxu0 0.0
    %827 = vmatprep.subr.mxu0 0.0
    %828 = vmatpush1.msra.mxu0 0.0
    %829 = vmatprep.subr.mxu0 0.0
    %830 = vmatpush1.msra.mxu0 0.0
    %831 = vmatprep.subr.mxu0 0.0
    %832 = vmatpush1.msra.mxu0 0.0
    %833 = vmatprep.subr.mxu0 0.0
    %834 = vmatpush1.msra.mxu0 0.0
    %835 = vmatprep.subr.mxu0 0.0
    %836 = vmatpush1.msra.mxu0 0.0
    %837 = vmatprep.subr.mxu0 0.0
    %838 = vmatpush1.msra.mxu0 0.0
    %839 = vmatprep.subr.mxu0 0.0
    %840 = vmatpush1.msra.mxu0 0.0
    %841 = vmatprep.subr.mxu0 0.0
    %842 = vmatpush1.msra.mxu0 0.0
    %843 = vmatprep.subr.mxu0 0.0
    %844 = vmatpush1.msra.mxu0 0.0
    %845 = vmatprep.subr.mxu0 0.0
    %846 = vmatpush1.msra.mxu0 0.0
    %847 = vmatprep.subr.mxu0 0.0
    %848 = vmatpush1.msra.mxu0 0.0
    %849 = vmatprep.subr.mxu0 0.0
    %850 = vmatpush1.msra.mxu0 0.0
    %851 = vmatprep.subr.mxu0 0.0
    %852 = vmatpush1.msra.mxu0 0.0
    %853 = vmatprep.subr.mxu0 0.0
    %854 = vmatpush1.msra.mxu0 0.0
    %855 = vmatprep.subr.mxu0 0.0
    %856 = vmatpush1.msra.mxu0 0.0
    %857 = vmatprep.subr.mxu0 0.0
    %858 = vmatpush1.msra.mxu0 0.0
    %859 = vmatprep.subr.mxu0 0.0
    %860 = vmatpush1.msra.mxu0 0.0
    %861 = vmatprep.subr.mxu0 0.0
    %862 = vmatpush1.msra.mxu0 0.0
    %863 = vmatprep.subr.mxu0 0.0
    %864 = vmatpush1.msra.mxu0 0.0
    %865 = vmatprep.subr.mxu0 0.0
    %866 = vmatpush1.msra.mxu0 0.0
    %867 = vmatprep.subr.mxu0 0.0
    %868 = vmatpush1.msra.mxu0 0.0
    %869 = vmatprep.subr.mxu0 0.0
    %870 = vmatpush1.msra.mxu0 0.0
    %871 = vmatprep.mubr.f32.mxu0 0.0
    %872 = vmatmul.mubr.f32.gmra.mrb[0].mxu0 %v798
    %v873 = vpop.f32.mrb[0].mxu0
    %v874 = vadd.f32 0.0, %v873
    %v875 = vpop.f32.mrb[0].mxu0
    %876 = vmatprep.mubr.f32.mxu0 0.0
    %877 = vmatmul.mubr.f32.gmra.mrb[0].mxu0 %v801
    %v878 = vpop.f32.mrb[0].mxu0
    %v879 = vadd.f32 0.0, %v878
    %v880 = vpop.f32.mrb[0].mxu0
    %881 = vdwg.mxu0
    %v883 = vsel %vm138, %v386, 0
    %v886 = vsel %vm138, %v462, 0
    %v889 = vsel %vm803, %v465, 0
    %891 = vmatprep.subr.mxu0 0.0
    %892 = vmatpush1.msra.mxu0 %v889
    %893 = vmatprep.subr.mxu0 0.0
    %894 = vmatpush1.msra.mxu0 0.0
    %895 = vmatprep.subr.mxu0 0.0
    %896 = vmatpush1.msra.mxu0 0.0
    %897 = vmatprep.subr.mxu0 0.0
    %898 = vmatpush1.msra.mxu0 0.0
    %899 = vmatprep.subr.mxu0 0.0
    %900 = vmatpush1.msra.mxu0 0.0
    %901 = vmatprep.subr.mxu0 0.0
    %902 = vmatpush1.msra.mxu0 0.0
    %903 = vmatprep.subr.mxu0 0.0
    %904 = vmatpush1.msra.mxu0 0.0
    %905 = vmatprep.subr.mxu0 0.0
    %906 = vmatpush1.msra.mxu0 0.0
    %907 = vmatprep.subr.mxu0 0.0
    %908 = vmatpush1.msra.mxu0 0.0
    %909 = vmatprep.subr.mxu0 0.0
    %910 = vmatpush1.msra.mxu0 0.0
    %911 = vmatprep.subr.mxu0 0.0
    %912 = vmatpush1.msra.mxu0 0.0
    %913 = vmatprep.subr.mxu0 0.0
    %914 = vmatpush1.msra.mxu0 0.0
    %915 = vmatprep.subr.mxu0 0.0
    %916 = vmatpush1.msra.mxu0 0.0
    %917 = vmatprep.subr.mxu0 0.0
    %918 = vmatpush1.msra.mxu0 0.0
    %919 = vmatprep.subr.mxu0 0.0
    %920 = vmatpush1.msra.mxu0 0.0
    %921 = vmatprep.subr.mxu0 0.0
    %922 = vmatpush1.msra.mxu0 0.0
    %923 = vmatprep.subr.mxu0 0.0
    %924 = vmatpush1.msra.mxu0 0.0
    %925 = vmatprep.subr.mxu0 0.0
    %926 = vmatpush1.msra.mxu0 0.0
    %927 = vmatprep.subr.mxu0 0.0
    %928 = vmatpush1.msra.mxu0 0.0
    %929 = vmatprep.subr.mxu0 0.0
    %930 = vmatpush1.msra.mxu0 0.0
    %931 = vmatprep.subr.mxu0 0.0
    %932 = vmatpush1.msra.mxu0 0.0
    %933 = vmatprep.subr.mxu0 0.0
    %934 = vmatpush1.msra.mxu0 0.0
    %935 = vmatprep.subr.mxu0 0.0
    %936 = vmatpush1.msra.mxu0 0.0
    %937 = vmatprep.subr.mxu0 0.0
    %938 = vmatpush1.msra.mxu0 0.0
    %939 = vmatprep.subr.mxu0 0.0
    %940 = vmatpush1.msra.mxu0 0.0
    %941 = vmatprep.subr.mxu0 0.0
    %942 = vmatpush1.msra.mxu0 0.0
    %943 = vmatprep.subr.mxu0 0.0
    %944 = vmatpush1.msra.mxu0 0.0
    %945 = vmatprep.subr.mxu0 0.0
    %946 = vmatpush1.msra.mxu0 0.0
    %947 = vmatprep.subr.mxu0 0.0
    %948 = vmatpush1.msra.mxu0 0.0
    %949 = vmatprep.subr.mxu0 0.0
    %950 = vmatpush1.msra.mxu0 0.0
    %951 = vmatprep.subr.mxu0 0.0
    %952 = vmatpush1.msra.mxu0 0.0
    %953 = vmatprep.subr.mxu0 0.0
    %954 = vmatpush1.msra.mxu0 0.0
    %955 = vmatprep.mubr.f32.mxu0 0.0
    %956 = vmatmul.mubr.f32.gmra.mrb[0].mxu0 %v883
    %v957 = vpop.f32.mrb[0].mxu0
    %v958 = vadd.f32 %v874, %v957
    %v959 = vpop.f32.mrb[0].mxu0
    %960 = vmatprep.mubr.f32.mxu0 0.0
    %961 = vmatmul.mubr.f32.gmra.mrb[0].mxu0 %v886
    %v962 = vpop.f32.mrb[0].mxu0
    %v963 = vadd.f32 %v879, %v962
    %v964 = vpop.f32.mrb[0].mxu0
    %965 = vdwg.mxu0
    %966 = vrot.lane.b32.xlu0 %v127, 122
    %v967 = vpop.permute.xlu0 %966
    %968 = vrot.lane.b32.xlu0 %v127, 113
    %v969 = vpop.permute.xlu0 %968
    %v970 = vsel %vm138, %v967, 0
    %v972 = vsel %vm138, %v969, 0
    %974 = vmatprep.subr.mxu0 0.0
    %975 = vmatpush1.xpose.msra.mxu0 %v972
    %976 = vmatprep.subr.mxu0 0.0
    %977 = vmatpush1.xpose.msra.mxu0 0.0
    %978 = vmatprep.subr.mxu0 0.0
    %979 = vmatpush1.xpose.msra.mxu0 0.0
    %980 = vmatprep.subr.mxu0 0.0
    %981 = vmatpush1.xpose.msra.mxu0 0.0
    %982 = vmatprep.subr.mxu0 0.0
    %983 = vmatpush1.xpose.msra.mxu0 0.0
    %984 = vmatprep.subr.mxu0 0.0
    %985 = vmatpush1.xpose.msra.mxu0 0.0
    %986 = vmatprep.subr.mxu0 0.0
    %987 = vmatpush1.xpose.msra.mxu0 0.0
    %988 = vmatprep.subr.mxu0 0.0
    %989 = vmatpush1.xpose.msra.mxu0 0.0
    %990 = vmatprep.subr.mxu0 0.0
    %991 = vmatpush1.xpose.msra.mxu0 0.0
    %992 = vmatprep.subr.mxu0 0.0
    %993 = vmatpush1.xpose.msra.mxu0 0.0
    %994 = vmatprep.subr.mxu0 0.0
    %995 = vmatpush1.xpose.msra.mxu0 0.0
    %996 = vmatprep.subr.mxu0 0.0
    %997 = vmatpush1.xpose.msra.mxu0 0.0
    %998 = vmatprep.subr.mxu0 0.0
    %999 = vmatpush1.xpose.msra.mxu0 0.0
    %1000 = vmatprep.subr.mxu0 0.0
    %1001 = vmatpush1.xpose.msra.mxu0 0.0
    %1002 = vmatprep.subr.mxu0 0.0
    %1003 = vmatpush1.xpose.msra.mxu0 0.0
    %1004 = vmatprep.subr.mxu0 0.0
    %1005 = vmatpush1.xpose.msra.mxu0 0.0
    %1006 = vmatprep.subr.mxu0 0.0
    %1007 = vmatpush1.xpose.msra.mxu0 0.0
    %1008 = vmatprep.subr.mxu0 0.0
    %1009 = vmatpush1.xpose.msra.mxu0 0.0
    %1010 = vmatprep.subr.mxu0 0.0
    %1011 = vmatpush1.xpose.msra.mxu0 0.0
    %1012 = vmatprep.subr.mxu0 0.0
    %1013 = vmatpush1.xpose.msra.mxu0 0.0
    %1014 = vmatprep.subr.mxu0 0.0
    %1015 = vmatpush1.xpose.msra.mxu0 0.0
    %1016 = vmatprep.subr.mxu0 0.0
    %1017 = vmatpush1.xpose.msra.mxu0 0.0
    %1018 = vmatprep.subr.mxu0 0.0
    %1019 = vmatpush1.xpose.msra.mxu0 0.0
    %1020 = vmatprep.subr.mxu0 0.0
    %1021 = vmatpush1.xpose.msra.mxu0 0.0
    %1022 = vmatprep.subr.mxu0 0.0
    %1023 = vmatpush1.xpose.msra.mxu0 0.0
    %1024 = vmatprep.subr.mxu0 0.0
    %1025 = vmatpush1.xpose.msra.mxu0 0.0
    %1026 = vmatprep.subr.mxu0 0.0
    %1027 = vmatpush1.xpose.msra.mxu0 0.0
    %1028 = vmatprep.subr.mxu0 0.0
    %1029 = vmatpush1.xpose.msra.mxu0 0.0
    %1030 = vmatprep.subr.mxu0 0.0
    %1031 = vmatpush1.xpose.msra.mxu0 0.0
    %1032 = vmatprep.subr.mxu0 0.0
    %1033 = vmatpush1.xpose.msra.mxu0 0.0
    %1034 = vmatprep.subr.mxu0 0.0
    %1035 = vmatpush1.xpose.msra.mxu0 0.0
    %1036 = vmatprep.subr.mxu0 0.0
    %1037 = vmatpush1.xpose.msra.mxu0 0.0
    %1038 = vmatprep.mubr.f32.mxu0 0.0
    %1039 = vmatmul.mubr.f32.gmra.mrb[0].mxu0 %v970
    %v1040 = vpop.f32.mrb[0].mxu0
    %v1041 = vadd.f32 0.0, %v1040
    %v1042 = vpop.f32.mrb[0].mxu0
    %1043 = vdwg.mxu0
    %1044 = vrot.lane.b32.xlu0 %v132, 122
    %v1045 = vpop.permute.xlu0 %1044
    %1046 = vrot.lane.b32.xlu0 %v132, 113
    %v1047 = vpop.permute.xlu0 %1046
    %v1048 = vsel %vm138, %v1045, 0
    %v1050 = vsel %vm138, %v1047, 0
    %1052 = vmatprep.subr.mxu0 0.0
    %1053 = vmatpush1.xpose.msra.mxu0 %v1050
    %1054 = vmatprep.subr.mxu0 0.0
    %1055 = vmatpush1.xpose.msra.mxu0 0.0
    %1056 = vmatprep.subr.mxu0 0.0
    %1057 = vmatpush1.xpose.msra.mxu0 0.0
    %1058 = vmatprep.subr.mxu0 0.0
    %1059 = vmatpush1.xpose.msra.mxu0 0.0
    %1060 = vmatprep.subr.mxu0 0.0
    %1061 = vmatpush1.xpose.msra.mxu0 0.0
    %1062 = vmatprep.subr.mxu0 0.0
    %1063 = vmatpush1.xpose.msra.mxu0 0.0
    %1064 = vmatprep.subr.mxu0 0.0
    %1065 = vmatpush1.xpose.msra.mxu0 0.0
    %1066 = vmatprep.subr.mxu0 0.0
    %1067 = vmatpush1.xpose.msra.mxu0 0.0
    %1068 = vmatprep.subr.mxu0 0.0
    %1069 = vmatpush1.xpose.msra.mxu0 0.0
    %1070 = vmatprep.subr.mxu0 0.0
    %1071 = vmatpush1.xpose.msra.mxu0 0.0
    %1072 = vmatprep.subr.mxu0 0.0
    %1073 = vmatpush1.xpose.msra.mxu0 0.0
    %1074 = vmatprep.subr.mxu0 0.0
    %1075 = vmatpush1.xpose.msra.mxu0 0.0
    %1076 = vmatprep.subr.mxu0 0.0
    %1077 = vmatpush1.xpose.msra.mxu0 0.0
    %1078 = vmatprep.subr.mxu0 0.0
    %1079 = vmatpush1.xpose.msra.mxu0 0.0
    %1080 = vmatprep.subr.mxu0 0.0
    %1081 = vmatpush1.xpose.msra.mxu0 0.0
    %1082 = vmatprep.subr.mxu0 0.0
    %1083 = vmatpush1.xpose.msra.mxu0 0.0
    %1084 = vmatprep.subr.mxu0 0.0
    %1085 = vmatpush1.xpose.msra.mxu0 0.0
    %1086 = vmatprep.subr.mxu0 0.0
    %1087 = vmatpush1.xpose.msra.mxu0 0.0
    %1088 = vmatprep.subr.mxu0 0.0
    %1089 = vmatpush1.xpose.msra.mxu0 0.0
    %1090 = vmatprep.subr.mxu0 0.0
    %1091 = vmatpush1.xpose.msra.mxu0 0.0
    %1092 = vmatprep.subr.mxu0 0.0
    %1093 = vmatpush1.xpose.msra.mxu0 0.0
    %1094 = vmatprep.subr.mxu0 0.0
    %1095 = vmatpush1.xpose.msra.mxu0 0.0
    %1096 = vmatprep.subr.mxu0 0.0
    %1097 = vmatpush1.xpose.msra.mxu0 0.0
    %1098 = vmatprep.subr.mxu0 0.0
    %1099 = vmatpush1.xpose.msra.mxu0 0.0
    %1100 = vmatprep.subr.mxu0 0.0
    %1101 = vmatpush1.xpose.msra.mxu0 0.0
    %1102 = vmatprep.subr.mxu0 0.0
    %1103 = vmatpush1.xpose.msra.mxu0 0.0
    %1104 = vmatprep.subr.mxu0 0.0
    %1105 = vmatpush1.xpose.msra.mxu0 0.0
    %1106 = vmatprep.subr.mxu0 0.0
    %1107 = vmatpush1.xpose.msra.mxu0 0.0
    %1108 = vmatprep.subr.mxu0 0.0
    %1109 = vmatpush1.xpose.msra.mxu0 0.0
    %1110 = vmatprep.subr.mxu0 0.0
    %1111 = vmatpush1.xpose.msra.mxu0 0.0
    %1112 = vmatprep.subr.mxu0 0.0
    %1113 = vmatpush1.xpose.msra.mxu0 0.0
    %1114 = vmatprep.subr.mxu0 0.0
    %1115 = vmatpush1.xpose.msra.mxu0 0.0
    %1116 = vmatprep.mubr.f32.mxu0 0.0
    %1117 = vmatmul.mubr.f32.gmra.mrb[0].mxu0 %v1048
    %v1118 = vpop.f32.mrb[0].mxu0
    %v1119 = vadd.f32 0.0, %v1118
    %v1120 = vpop.f32.mrb[0].mxu0
    %1121 = vdwg.mxu0
    %v1122 = vsel %vm290, %v1041, -inf
    %1123 = vmax.xlane.f32.xlu0 %v1122
    %v1124 = vpop.xlane.xlu0 %1123
    %v1125 = vsel %vm290, %v1119, -inf
    %1126 = vmax.xlane.f32.xlu0 %v1125
    %v1127 = vpop.xlane.xlu0 %1126
    %v1128 = vsub.f32 %v1041, %v1124
    %v1129 = vsub.f32 %v1119, %v1127
    %v1130 = vmul.f32 %v1128, 1.442695
    %v1131 = vpow.pop %v1130
    %v1132 = vmul.f32 %v1129, 1.442695
    %v1133 = vpow.pop %v1132
    %v1134 = vsel %vm290, %v1131, 0.0
    %1135 = vadd.xlane.f32.xlu0 %v1134
    %v1136 = vpop.xlane.xlu0 %1135
    %v1137 = vsel %vm290, %v1133, 0.0
    %1138 = vadd.xlane.f32.xlu0 %v1137
    %v1139 = vpop.xlane.xlu0 %1138
    %v1140 = vrcp.pop %v1136
    %v1141 = vmul.f32 %v1131, %v1140
    %v1142 = vrcp.pop %v1139
    %v1143 = vmul.f32 %v1133, %v1142
    %1144 = vrot.lane.b32.xlu0 %v127, 104
    %v1145 = vpop.permute.xlu0 %1144
    %v1148 = vsel %vm290, %v1141, 0
    %1150 = vmatprep.subr.mxu0 0.0
    %1151 = vmatpush1.msra.mxu0 %v1145
    %1152 = vmatprep.subr.mxu0 0.0
    %1153 = vmatpush1.msra.mxu0 0.0
    %1154 = vmatprep.subr.mxu0 0.0
    %1155 = vmatpush1.msra.mxu0 0.0
    %1156 = vmatprep.subr.mxu0 0.0
    %1157 = vmatpush1.msra.mxu0 0.0
    %1158 = vmatprep.subr.mxu0 0.0
    %1159 = vmatpush1.msra.mxu0 0.0
    %1160 = vmatprep.subr.mxu0 0.0
    %1161 = vmatpush1.msra.mxu0 0.0
    %1162 = vmatprep.subr.mxu0 0.0
    %1163 = vmatpush1.msra.mxu0 0.0
    %1164 = vmatprep.subr.mxu0 0.0
    %1165 = vmatpush1.msra.mxu0 0.0
    %1166 = vmatprep.subr.mxu0 0.0
    %1167 = vmatpush1.msra.mxu0 0.0
    %1168 = vmatprep.subr.mxu0 0.0
    %1169 = vmatpush1.msra.mxu0 0.0
    %1170 = vmatprep.subr.mxu0 0.0
    %1171 = vmatpush1.msra.mxu0 0.0
    %1172 = vmatprep.subr.mxu0 0.0
    %1173 = vmatpush1.msra.mxu0 0.0
    %1174 = vmatprep.subr.mxu0 0.0
    %1175 = vmatpush1.msra.mxu0 0.0
    %1176 = vmatprep.subr.mxu0 0.0
    %1177 = vmatpush1.msra.mxu0 0.0
    %1178 = vmatprep.subr.mxu0 0.0
    %1179 = vmatpush1.msra.mxu0 0.0
    %1180 = vmatprep.subr.mxu0 0.0
    %1181 = vmatpush1.msra.mxu0 0.0
    %1182 = vmatprep.subr.mxu0 0.0
    %1183 = vmatpush1.msra.mxu0 0.0
    %1184 = vmatprep.subr.mxu0 0.0
    %1185 = vmatpush1.msra.mxu0 0.0
    %1186 = vmatprep.subr.mxu0 0.0
    %1187 = vmatpush1.msra.mxu0 0.0
    %1188 = vmatprep.subr.mxu0 0.0
    %1189 = vmatpush1.msra.mxu0 0.0
    %1190 = vmatprep.subr.mxu0 0.0
    %1191 = vmatpush1.msra.mxu0 0.0
    %1192 = vmatprep.subr.mxu0 0.0
    %1193 = vmatpush1.msra.mxu0 0.0
    %1194 = vmatprep.subr.mxu0 0.0
    %1195 = vmatpush1.msra.mxu0 0.0
    %1196 = vmatprep.subr.mxu0 0.0
    %1197 = vmatpush1.msra.mxu0 0.0
    %1198 = vmatprep.subr.mxu0 0.0
    %1199 = vmatpush1.msra.mxu0 0.0
    %1200 = vmatprep.subr.mxu0 0.0
    %1201 = vmatpush1.msra.mxu0 0.0
    %1202 = vmatprep.subr.mxu0 0.0
    %1203 = vmatpush1.msra.mxu0 0.0
    %1204 = vmatprep.subr.mxu0 0.0
    %1205 = vmatpush1.msra.mxu0 0.0
    %1206 = vmatprep.subr.mxu0 0.0
    %1207 = vmatpush1.msra.mxu0 0.0
    %1208 = vmatprep.subr.mxu0 0.0
    %1209 = vmatpush1.msra.mxu0 0.0
    %1210 = vmatprep.subr.mxu0 0.0
    %1211 = vmatpush1.msra.mxu0 0.0
    %1212 = vmatprep.subr.mxu0 0.0
    %1213 = vmatpush1.msra.mxu0 0.0
    %1214 = vmatprep.mubr.f32.mxu0 0.0
    %1215 = vmatmul.mubr.f32.gmra.mrb[0].mxu0 %v1148
    %v1216 = vpop.f32.mrb[0].mxu0
    %v1217 = vadd.f32 0.0, %v1216
    %v1218 = vpop.f32.mrb[0].mxu0
    %1219 = vdwg.mxu0
    %1220 = vrot.lane.b32.xlu0 %v132, 104
    %v1221 = vpop.permute.xlu0 %1220
    %v1224 = vsel %vm290, %v1143, 0
    %1226 = vmatprep.subr.mxu0 0.0
    %1227 = vmatpush1.msra.mxu0 %v1221
    %1228 = vmatprep.subr.mxu0 0.0
    %1229 = vmatpush1.msra.mxu0 0.0
    %1230 = vmatprep.subr.mxu0 0.0
    %1231 = vmatpush1.msra.mxu0 0.0
    %1232 = vmatprep.subr.mxu0 0.0
    %1233 = vmatpush1.msra.mxu0 0.0
    %1234 = vmatprep.subr.mxu0 0.0
    %1235 = vmatpush1.msra.mxu0 0.0
    %1236 = vmatprep.subr.mxu0 0.0
    %1237 = vmatpush1.msra.mxu0 0.0
    %1238 = vmatprep.subr.mxu0 0.0
    %1239 = vmatpush1.msra.mxu0 0.0
    %1240 = vmatprep.subr.mxu0 0.0
    %1241 = vmatpush1.msra.mxu0 0.0
    %1242 = vmatprep.subr.mxu0 0.0
    %1243 = vmatpush1.msra.mxu0 0.0
    %1244 = vmatprep.subr.mxu0 0.0
    %1245 = vmatpush1.msra.mxu0 0.0
    %1246 = vmatprep.subr.mxu0 0.0
    %1247 = vmatpush1.msra.mxu0 0.0
    %1248 = vmatprep.subr.mxu0 0.0
    %1249 = vmatpush1.msra.mxu0 0.0
    %1250 = vmatprep.subr.mxu0 0.0
    %1251 = vmatpush1.msra.mxu0 0.0
    %1252 = vmatprep.subr.mxu0 0.0
    %1253 = vmatpush1.msra.mxu0 0.0
    %1254 = vmatprep.subr.mxu0 0.0
    %1255 = vmatpush1.msra.mxu0 0.0
    %1256 = vmatprep.subr.mxu0 0.0
    %1257 = vmatpush1.msra.mxu0 0.0
    %1258 = vmatprep.subr.mxu0 0.0
    %1259 = vmatpush1.msra.mxu0 0.0
    %1260 = vmatprep.subr.mxu0 0.0
    %1261 = vmatpush1.msra.mxu0 0.0
    %1262 = vmatprep.subr.mxu0 0.0
    %1263 = vmatpush1.msra.mxu0 0.0
    %1264 = vmatprep.subr.mxu0 0.0
    %1265 = vmatpush1.msra.mxu0 0.0
    %1266 = vmatprep.subr.mxu0 0.0
    %1267 = vmatpush1.msra.mxu0 0.0
    %1268 = vmatprep.subr.mxu0 0.0
    %1269 = vmatpush1.msra.mxu0 0.0
    %1270 = vmatprep.subr.mxu0 0.0
    %1271 = vmatpush1.msra.mxu0 0.0
    %1272 = vmatprep.subr.mxu0 0.0
    %1273 = vmatpush1.msra.mxu0 0.0
    %1274 = vmatprep.subr.mxu0 0.0
    %1275 = vmatpush1.msra.mxu0 0.0
    %1276 = vmatprep.subr.mxu0 0.0
    %1277 = vmatpush1.msra.mxu0 0.0
    %1278 = vmatprep.subr.mxu0 0.0
    %1279 = vmatpush1.msra.mxu0 0.0
    %1280 = vmatprep.subr.mxu0 0.0
    %1281 = vmatpush1.msra.mxu0 0.0
    %1282 = vmatprep.subr.mxu0 0.0
    %1283 = vmatpush1.msra.mxu0 0.0
    %1284 = vmatprep.subr.mxu0 0.0
    %1285 = vmatpush1.msra.mxu0 0.0
    %1286 = vmatprep.subr.mxu0 0.0
    %1287 = vmatpush1.msra.mxu0 0.0
    %1288 = vmatprep.subr.mxu0 0.0
    %1289 = vmatpush1.msra.mxu0 0.0
    %1290 = vmatprep.mubr.f32.mxu0 0.0
    %1291 = vmatmul.mubr.f32.gmra.mrb[0].mxu0 %v1224
    %v1292 = vpop.f32.mrb[0].mxu0
    %v1293 = vadd.f32 0.0, %v1292
    %v1294 = vpop.f32.mrb[0].mxu0
    %1295 = vdwg.mxu0
    %v1296 = vld [vmem:[#allocation5 + $0x28] sm:$0x7]
    %v1298 = vsel %vm138, %v1217, 0
    %v1301 = vsel %vm138, %v1293, 0
    %v1304 = vsel %vm803, %v1296, 0
    %1306 = vmatprep.subr.mxu0 0.0
    %1307 = vmatpush1.msra.mxu0 %v1304
    %1308 = vmatprep.subr.mxu0 0.0
    %1309 = vmatpush1.msra.mxu0 0.0
    %1310 = vmatprep.subr.mxu0 0.0
    %1311 = vmatpush1.msra.mxu0 0.0
    %1312 = vmatprep.subr.mxu0 0.0
    %1313 = vmatpush1.msra.mxu0 0.0
    %1314 = vmatprep.subr.mxu0 0.0
    %1315 = vmatpush1.msra.mxu0 0.0
    %1316 = vmatprep.subr.mxu0 0.0
    %1317 = vmatpush1.msra.mxu0 0.0
    %1318 = vmatprep.subr.mxu0 0.0
    %1319 = vmatpush1.msra.mxu0 0.0
    %1320 = vmatprep.subr.mxu0 0.0
    %1321 = vmatpush1.msra.mxu0 0.0
    %1322 = vmatprep.subr.mxu0 0.0
    %1323 = vmatpush1.msra.mxu0 0.0
    %1324 = vmatprep.subr.mxu0 0.0
    %1325 = vmatpush1.msra.mxu0 0.0
    %1326 = vmatprep.subr.mxu0 0.0
    %1327 = vmatpush1.msra.mxu0 0.0
    %1328 = vmatprep.subr.mxu0 0.0
    %1329 = vmatpush1.msra.mxu0 0.0
    %1330 = vmatprep.subr.mxu0 0.0
    %1331 = vmatpush1.msra.mxu0 0.0
    %1332 = vmatprep.subr.mxu0 0.0
    %1333 = vmatpush1.msra.mxu0 0.0
    %1334 = vmatprep.subr.mxu0 0.0
    %1335 = vmatpush1.msra.mxu0 0.0
    %1336 = vmatprep.subr.mxu0 0.0
    %1337 = vmatpush1.msra.mxu0 0.0
    %1338 = vmatprep.subr.mxu0 0.0
    %1339 = vmatpush1.msra.mxu0 0.0
    %1340 = vmatprep.subr.mxu0 0.0
    %1341 = vmatpush1.msra.mxu0 0.0
    %1342 = vmatprep.subr.mxu0 0.0
    %1343 = vmatpush1.msra.mxu0 0.0
    %1344 = vmatprep.subr.mxu0 0.0
    %1345 = vmatpush1.msra.mxu0 0.0
    %1346 = vmatprep.subr.mxu0 0.0
    %1347 = vmatpush1.msra.mxu0 0.0
    %1348 = vmatprep.subr.mxu0 0.0
    %1349 = vmatpush1.msra.mxu0 0.0
    %1350 = vmatprep.subr.mxu0 0.0
    %1351 = vmatpush1.msra.mxu0 0.0
    %1352 = vmatprep.subr.mxu0 0.0
    %1353 = vmatpush1.msra.mxu0 0.0
    %1354 = vmatprep.subr.mxu0 0.0
    %1355 = vmatpush1.msra.mxu0 0.0
    %1356 = vmatprep.subr.mxu0 0.0
    %1357 = vmatpush1.msra.mxu0 0.0
    %1358 = vmatprep.subr.mxu0 0.0
    %1359 = vmatpush1.msra.mxu0 0.0
    %1360 = vmatprep.subr.mxu0 0.0
    %1361 = vmatpush1.msra.mxu0 0.0
    %1362 = vmatprep.subr.mxu0 0.0
    %1363 = vmatpush1.msra.mxu0 0.0
    %1364 = vmatprep.subr.mxu0 0.0
    %1365 = vmatpush1.msra.mxu0 0.0
    %1366 = vmatprep.subr.mxu0 0.0
    %1367 = vmatpush1.msra.mxu0 0.0
    %1368 = vmatprep.subr.mxu0 0.0
    %1369 = vmatpush1.msra.mxu0 0.0
    %1370 = vmatprep.mubr.f32.mxu0 0.0
    %1371 = vmatmul.mubr.f32.gmra.mrb[0].mxu0 %v1298
    %v1372 = vpop.f32.mrb[0].mxu0
    %v1373 = vadd.f32 0.0, %v1372
    %v1374 = vpop.f32.mrb[0].mxu0
    %1375 = vmatprep.mubr.f32.mxu0 0.0
    %1376 = vmatmul.mubr.f32.gmra.mrb[0].mxu0 %v1301
    %v1377 = vpop.f32.mrb[0].mxu0
    %v1378 = vadd.f32 0.0, %v1377
    %v1379 = vpop.f32.mrb[0].mxu0
    %1380 = vdwg.mxu0
    %v1381 = vadd.f32 %v958, %v1373
    %v1382 = vadd.f32 %v963, %v1378
    %v1383 = vld [vmem:[#allocation5 + $0x30] sm:$0x1]
    %v1384 = vlaneseq
    %v1385 = vshrl.u32 %v1384, 7
    %v1386 = vsub.s32 0, %v1385
    %v1387 = vrot.slane %v1383, %v1386
    %v1388 = vadd.f32 %v1381, %v1387
    %v1389 = vadd.f32 %v1382, %v1387
    %1390 = vst.msk [vmem:[#allocation7] sm:$0xff] %vm49, %v1388
    %1391 = vst.msk [vmem:[#allocation7 + $0x8] sm:$0xff] %vm49, %v1389
    // Predicated region
    $region18: #{multi_head_attention.1} parent=1 // pred_check
      _
    $region19: #{multi_head_attention.1} parent=1 // pred_check_branch
      %1393 = sbr.rel (0) target = $region21
    $region20: #{multi_head_attention.1} parent=1 // pred_region
      %s1395 = ssub.s32 256, 256
      %1396 = vsyncadd [#allocation4], %s1395
      %s1397 = sshll.u32 [#allocation7], 4
      %s1398 = int_to_ptr.vmem [resolvable:$true] %s1397
      %1403 = dma.vmem_to_hbm [thread:$0]  %s1398, 256, %s2, [#allocation4], 128, 128, 8
    $region21: #{multi_head_attention.1} parent=1 // pred_fallthru
      _
    // Predicated region
    $region22: #{multi_head_attention.1} parent=1 // pred_check
      _
    $region23: #{multi_head_attention.1} parent=1 // pred_check_branch
      %1405 = sbr.rel (0) target = $region25
    $region24: #{multi_head_attention.1} parent=1 // pred_region
      %1406 = dma.done [#allocation4], 256
    $region25: #{multi_head_attention.1} parent=1 // pred_fallthru
      _
    %1407 = vsyncpa [#allocation3], 1
    %1408 = vsyncpa [#allocation6], 1
    %1409 = vsyncpa [#allocation4], 1

</llo_original>
